<compile_context>
chip_gen: v7x
topology: tpu7x:2x2x1
jax: 0.10.0
libtpu: 0.0.40
codegen_flags: <defaults>
</compile_context>

<pallas_src>
import jax
import jax.numpy as jnp
from jax import lax
from jax.experimental import pallas as pl
from jax.experimental.pallas import tpu as pltpu


def _upsample_conv_kernel(x_ref, w_ref, b_ref, o_ref):
    """Fused nearest-2x upsample + 3x3 conv for one (batch, row-tile) step.

    x_ref: (1, 1, TH+2, W+2, Cin)   halo'd original-resolution input tile
    w_ref: (4, 4*Cin, Cout)         fused per-subpixel-phase weights
    b_ref: (1, Cout)                bias (f32)
    o_ref: (1, 1, 4, TH*W, Cout)    4 output subpixel phases, spatial flattened
    """
    th = x_ref.shape[2] - 2
    tw = x_ref.shape[3] - 2
    cin = x_ref.shape[4]

    xt = x_ref[0, 0]          # (TH+2, W+2, Cin)
    bias = b_ref[0]           # (Cout,) f32

    # Static unroll over the 4 subpixel phases (py, px).
    for py in range(2):
        for px in range(2):
            p = 2 * py + px
            # 2x2 window of the original image seen by this phase:
            #   tap (a, b) -> rows [py+a, py+a+TH), cols [px+b, px+b+W).
            # Concatenate the 4 taps on the channel (lane) axis so the MXU
            # sees a single deep contraction of K = 4*Cin.
            taps = jnp.concatenate(
                [xt[py + a:py + a + th, px + b:px + b + tw, :]
                 for a in range(2) for b in range(2)],
                axis=-1)                                   # (TH, W, 4*Cin)
            taps2d = taps.reshape(th * tw, 4 * cin)
            acc = jnp.dot(taps2d, w_ref[p],
                          preferred_element_type=jnp.float32)
            o_ref[0, 0, p] = (acc + bias).astype(o_ref.dtype)


def _fused_phase_weights(weight):
    """Torch-layout (Cout, Cin, 3, 3) conv weight -> (4, 4*Cin, Cout).

    Subpixel identity: output pixel (2*yi+py, 2*xi+px) of
    conv3x3(pad=1, nearest_up2x(x)) only touches the original-image window
    rows {yi-1+py, yi+py}, cols {xi-1+px, xi+px}; the 3x3 taps collapse onto
    that 2x2 window with summed weights.
    """
    w = jnp.transpose(weight, (2, 3, 1, 0)).astype(jnp.float32)  # (kh,kw,Cin,Cout)
    # phase 0: tap a=0 <- kh {0};   tap a=1 <- kh {1, 2}
    # phase 1: tap a=0 <- kh {0,1}; tap a=1 <- kh {2}
    groups = {0: ([0], [1, 2]), 1: ([0, 1], [2])}
    phases = []
    for py in range(2):
        ga = groups[py]
        for px in range(2):
            gb = groups[px]
            taps = []
            for a in range(2):
                for b in range(2):
                    acc = 0.0
                    for kh in ga[a]:
                        for kw in gb[b]:
                            acc = acc + w[kh, kw]          # (Cin, Cout)
                    taps.append(acc)
            phases.append(jnp.concatenate(taps, axis=0))   # (4*Cin, Cout)
    return jnp.stack(phases, axis=0)                       # (4, 4*Cin, Cout)


def _choose_tile_h(H, W, C, in_bytes, out_bytes, budget_bytes=6 << 20):
    """Largest row-tile (divisor of H) whose in+out tiles fit the VMEM budget."""
    best = 1
    for th in range(1, H + 1):
        if H % th:
            continue
        in_tile = (th + 2) * (W + 2) * C * in_bytes
        out_tile = 4 * th * W * C * out_bytes
        if in_tile + out_tile <= budget_bytes:
            best = th
    return best


def upsample_forward(x_nchw, weight, bias, *, compute_dtype=None):
    """UpSample.forward: nearest 2x upsample + Conv2d(C, C, 3, padding=1).

    NCHW in / NCHW out (PyTorch convention).  `compute_dtype=jnp.bfloat16`
    runs the MXU in bf16 with f32 accumulation.
    """
    N, C, H, W = x_nchw.shape
    Ho, Wo = 2 * H, 2 * W
    out_dtype = x_nchw.dtype
    cdt = jnp.dtype(compute_dtype) if compute_dtype is not None else jnp.dtype(out_dtype)

    # ---- wrapper glue: layout only (fused under jit), ~1x input bytes ----
    x = jnp.transpose(x_nchw, (0, 2, 3, 1))                 # NHWC, C on lanes
    xp = jnp.pad(x, ((0, 0), (1, 1), (1, 1), (0, 0)))       # conv padding=1

    th = _choose_tile_h(H, W, C, cdt.itemsize, jnp.dtype(out_dtype).itemsize)
    n_tiles = H // th
    # Row tiles with a 1-row halo on each side (2 extra rows per tile: cheap).
    tiles = jnp.stack([xp[:, t * th:t * th + th + 2] for t in range(n_tiles)],
                      axis=1).astype(cdt)                   # (N, nt, TH+2, W+2, C)

    wf = _fused_phase_weights(weight).astype(cdt)           # (4, 4*C, C)
    b2 = bias.reshape(1, C).astype(jnp.float32)

    in_tile_b = (th + 2) * (W + 2) * C * cdt.itemsize
    out_tile_b = 4 * th * W * C * jnp.dtype(out_dtype).itemsize
    # double-buffered in/out tiles + weights + headroom, clamped for v7x (64 MiB).
    vmem_limit = int(min(max(4 * (in_tile_b + out_tile_b) + (2 << 20), 16 << 20),
                         40 << 20))

    out = pl.pallas_call(
        _upsample_conv_kernel,
        out_shape=jax.ShapeDtypeStruct((N, n_tiles, 4, th * W, C), out_dtype),
        grid=(N, n_tiles),
        in_specs=[
            pl.BlockSpec((1, 1, th + 2, W + 2, C), lambda n, t: (n, t, 0, 0, 0)),
            pl.BlockSpec((4, 4 * C, C), lambda n, t: (0, 0, 0)),   # VMEM-resident
            pl.BlockSpec((1, C), lambda n, t: (0, 0)),             # VMEM-resident
        ],
        out_specs=pl.BlockSpec((1, 1, 4, th * W, C),
                               lambda n, t: (n, t, 0, 0, 0)),
        compiler_params=pltpu.CompilerParams(
            dimension_semantics=("parallel", "parallel"),
            vmem_limit_bytes=vmem_limit),
    )(tiles, wf, b2)

    # (N, nt, phase, TH*W, C) -> interleave the 2x2 subpixel phases -> NCHW.
    # reshape / reshape are free; the single transpose is the unavoidable
    # NHWC(lane-C) -> NCHW layout move.
    out = out.reshape(N, n_tiles, 2, 2, th, W, C)
    out = jnp.transpose(out, (0, 6, 1, 4, 2, 5, 3))          # (N, C, nt, TH, 2, W, 2)
    return out.reshape(N, C, Ho, Wo)


# Jitted entry point: fuses the layout glue around the Pallas kernel.
upsample_forward_jit = jax.jit(upsample_forward, static_argnames=("compute_dtype",))


def _reference(x_nchw, weight, bias):
    """Pure-JAX reference: interpolate(scale=2, nearest) + Conv2d(3x3, pad=1)."""
    x_up = jnp.repeat(jnp.repeat(x_nchw, 2, axis=2), 2, axis=3)
    y = lax.conv_general_dilated(
        x_up, weight, window_strides=(1, 1), padding=((1, 1), (1, 1)),
        dimension_numbers=('NCHW', 'OIHW', 'NCHW'))
    return y + bias[None, :, None, None]


if __name__ == "__main__":
    key = jax.random.PRNGKey(0)
    k_x, k_w, k_b = jax.random.split(key, 3)

    N, C, H, W = 2, 4, 16, 16
    x = jax.random.normal(k_x, (N, C, H, W), dtype=jnp.float32)
    # Deterministic synthetic Conv2d(channels, channels, 3, padding=1) params.
    weight = jax.random.normal(k_w, (C, C, 3, 3), dtype=jnp.float32) * 0.1
    bias = jax.random.normal(k_b, (C,), dtype=jnp.float32) * 0.1

    ref = jax.block_until_ready(_reference(x, weight, bias))

    out = jax.block_until_ready(upsample_forward_jit(x, weight, bias))
    assert out.shape == (N, C, 2 * H, 2 * W), out.shape
    assert jnp.allclose(out, ref, atol=1e-4, rtol=1e-4), \
        float(jnp.max(jnp.abs(out - ref)))

    # bf16 MXU path (f32 accumulation) -- looser tolerance for bf16 inputs.
    out_bf16 = jax.block_until_ready(
        upsample_forward_jit(x, weight, bias, compute_dtype=jnp.bfloat16))
    assert float(jnp.max(jnp.abs(out_bf16 - ref))) < 5e-2, \
        float(jnp.max(jnp.abs(out_bf16 - ref)))

    print("KERNEL_OK")
</pallas_src>

<mosaic_0001>
module attributes {stable_mosaic.version = 11 : i64} {
  func.func @_upsample_conv_kernel(%arg0: i32, %arg1: i32, %arg2: memref<1x1x18x18x4xf32, #tpu.memory_space<vmem>>, %arg3: memref<4x16x4xf32, #tpu.memory_space<vmem>>, %arg4: memref<1x4xf32, #tpu.memory_space<vmem>>, %arg5: memref<1x1x4x256x4xf32, #tpu.memory_space<vmem>>) attributes {dimension_semantics = [#tpu.dimension_semantics<parallel>, #tpu.dimension_semantics<parallel>], iteration_bounds = array<i64: 2, 1>, scalar_prefetch = 0 : i64, scratch_operands = 0 : i64, tpu.core_type = #tpu.core_type<tc>, window_params = [{transform_indices = @transform_0, window_bounds = array<i64: 1, 1, 18, 18, 4>}, {pipeline_mode = #tpu.pipeline_mode<synchronous>, transform_indices = @transform_1, window_bounds = array<i64: 4, 16, 4>}, {pipeline_mode = #tpu.pipeline_mode<synchronous>, transform_indices = @transform_2, window_bounds = array<i64: 1, 4>}, {transform_indices = @transform_3, window_bounds = array<i64: 1, 1, 4, 256, 4>}]} {
    %c0 = arith.constant 0 : index
    %c0_0 = arith.constant 0 : index
    %c0_1 = arith.constant 0 : index
    %c0_2 = arith.constant 0 : index
    %c0_3 = arith.constant 0 : index
    %0 = vector.load %arg2[%c0, %c0_0, %c0_1, %c0_2, %c0_3] : memref<1x1x18x18x4xf32, #tpu.memory_space<vmem>>, vector<1x1x18x18x4xf32>
    %1 = vector.shape_cast %0 : vector<1x1x18x18x4xf32> to vector<18x18x4xf32>
    %c0_4 = arith.constant 0 : index
    %c0_5 = arith.constant 0 : index
    %2 = vector.load %arg4[%c0_4, %c0_5] : memref<1x4xf32, #tpu.memory_space<vmem>>, vector<1x4xf32>
    %3 = vector.shape_cast %2 : vector<1x4xf32> to vector<4xf32>
    %4 = vector.extract_strided_slice %1 {offsets = [0, 0, 0], sizes = [16, 16, 4], strides = [1, 1, 1]} : vector<18x18x4xf32> to vector<16x16x4xf32>
    %5 = vector.extract_strided_slice %1 {offsets = [0, 1, 0], sizes = [16, 16, 4], strides = [1, 1, 1]} : vector<18x18x4xf32> to vector<16x16x4xf32>
    %6 = vector.extract_strided_slice %1 {offsets = [1, 0, 0], sizes = [16, 16, 4], strides = [1, 1, 1]} : vector<18x18x4xf32> to vector<16x16x4xf32>
    %7 = vector.extract_strided_slice %1 {offsets = [1, 1, 0], sizes = [16, 16, 4], strides = [1, 1, 1]} : vector<18x18x4xf32> to vector<16x16x4xf32>
    %8 = tpu.concatenate %4, %5, %6, %7 in 2 : vector<16x16x4xf32>, vector<16x16x4xf32>, vector<16x16x4xf32>, vector<16x16x4xf32> -> vector<16x16x16xf32>
    %9 = vector.shape_cast %8 : vector<16x16x16xf32> to vector<256x16xf32>
    %c0_6 = arith.constant 0 : index
    %c0_7 = arith.constant 0 : index
    %c0_8 = arith.constant 0 : index
    %10 = vector.load %arg3[%c0_6, %c0_7, %c0_8] : memref<4x16x4xf32, #tpu.memory_space<vmem>>, vector<1x16x4xf32>
    %11 = vector.shape_cast %10 : vector<1x16x4xf32> to vector<16x4xf32>
    %cst = arith.constant dense<0.000000e+00> : vector<256x4xf32>
    %12 = tpu.matmul %9, %11, %cst {dimension_numbers = #tpu.dot_dimension_numbers<[1], [0], [0], [1], [0, 0, 1, 1], [], []>} : vector<256x16xf32>, vector<16x4xf32>, vector<256x4xf32> -> vector<256x4xf32>
    %13 = vector.shape_cast %3 : vector<4xf32> to vector<1x4xf32>
    %14 = vector.broadcast %13 : vector<1x4xf32> to vector<256x4xf32>
    %15 = arith.addf %12, %14 : vector<256x4xf32>
    %c0_9 = arith.constant 0 : index
    %c0_10 = arith.constant 0 : index
    %c0_11 = arith.constant 0 : index
    %c0_12 = arith.constant 0 : index
    %c0_13 = arith.constant 0 : index
    %16 = vector.load %arg5[%c0_9, %c0_10, %c0_11, %c0_12, %c0_13] : memref<1x1x4x256x4xf32, #tpu.memory_space<vmem>>, vector<1x1x1x256x4xf32>
    %17 = vector.shape_cast %16 : vector<1x1x1x256x4xf32> to vector<256x4xf32>
    %18 = vector.shape_cast %15 : vector<256x4xf32> to vector<1x1x1x256x4xf32>
    tpu.vector_store %arg5[%c0_9, %c0_10, %c0_11, %c0_12, %c0_13], %18 {strides = array<i32>} : memref<1x1x4x256x4xf32, #tpu.memory_space<vmem>>, vector<1x1x1x256x4xf32>,
    %19 = vector.extract_strided_slice %1 {offsets = [0, 1, 0], sizes = [16, 16, 4], strides = [1, 1, 1]} : vector<18x18x4xf32> to vector<16x16x4xf32>
    %20 = vector.extract_strided_slice %1 {offsets = [0, 2, 0], sizes = [16, 16, 4], strides = [1, 1, 1]} : vector<18x18x4xf32> to vector<16x16x4xf32>
    %21 = vector.extract_strided_slice %1 {offsets = [1, 1, 0], sizes = [16, 16, 4], strides = [1, 1, 1]} : vector<18x18x4xf32> to vector<16x16x4xf32>
    %22 = vector.extract_strided_slice %1 {offsets = [1, 2, 0], sizes = [16, 16, 4], strides = [1, 1, 1]} : vector<18x18x4xf32> to vector<16x16x4xf32>
    %23 = tpu.concatenate %19, %20, %21, %22 in 2 : vector<16x16x4xf32>, vector<16x16x4xf32>, vector<16x16x4xf32>, vector<16x16x4xf32> -> vector<16x16x16xf32>
    %24 = vector.shape_cast %23 : vector<16x16x16xf32> to vector<256x16xf32>
    %c1 = arith.constant 1 : index
    %c0_14 = arith.constant 0 : index
    %c0_15 = arith.constant 0 : index
    %25 = vector.load %arg3[%c1, %c0_14, %c0_15] : memref<4x16x4xf32, #tpu.memory_space<vmem>>, vector<1x16x4xf32>
    %26 = vector.shape_cast %25 : vector<1x16x4xf32> to vector<16x4xf32>
    %cst_16 = arith.constant dense<0.000000e+00> : vector<256x4xf32>
    %27 = tpu.matmul %24, %26, %cst_16 {dimension_numbers = #tpu.dot_dimension_numbers<[1], [0], [0], [1], [0, 0, 1, 1], [], []>} : vector<256x16xf32>, vector<16x4xf32>, vector<256x4xf32> -> vector<256x4xf32>
    %28 = vector.shape_cast %3 : vector<4xf32> to vector<1x4xf32>
    %29 = vector.broadcast %28 : vector<1x4xf32> to vector<256x4xf32>
    %30 = arith.addf %27, %29 : vector<256x4xf32>
    %c0_17 = arith.constant 0 : index
    %c0_18 = arith.constant 0 : index
    %c1_19 = arith.constant 1 : index
    %c0_20 = arith.constant 0 : index
    %c0_21 = arith.constant 0 : index
    %31 = vector.load %arg5[%c0_17, %c0_18, %c1_19, %c0_20, %c0_21] : memref<1x1x4x256x4xf32, #tpu.memory_space<vmem>>, vector<1x1x1x256x4xf32>
    %32 = vector.shape_cast %31 : vector<1x1x1x256x4xf32> to vector<256x4xf32>
    %33 = vector.shape_cast %30 : vector<256x4xf32> to vector<1x1x1x256x4xf32>
    tpu.vector_store %arg5[%c0_17, %c0_18, %c1_19, %c0_20, %c0_21], %33 {strides = array<i32>} : memref<1x1x4x256x4xf32, #tpu.memory_space<vmem>>, vector<1x1x1x256x4xf32>,
    %34 = vector.extract_strided_slice %1 {offsets = [1, 0, 0], sizes = [16, 16, 4], strides = [1, 1, 1]} : vector<18x18x4xf32> to vector<16x16x4xf32>
    %35 = vector.extract_strided_slice %1 {offsets = [1, 1, 0], sizes = [16, 16, 4], strides = [1, 1, 1]} : vector<18x18x4xf32> to vector<16x16x4xf32>
    %36 = vector.extract_strided_slice %1 {offsets = [2, 0, 0], sizes = [16, 16, 4], strides = [1, 1, 1]} : vector<18x18x4xf32> to vector<16x16x4xf32>
    %37 = vector.extract_strided_slice %1 {offsets = [2, 1, 0], sizes = [16, 16, 4], strides = [1, 1, 1]} : vector<18x18x4xf32> to vector<16x16x4xf32>
    %38 = tpu.concatenate %34, %35, %36, %37 in 2 : vector<16x16x4xf32>, vector<16x16x4xf32>, vector<16x16x4xf32>, vector<16x16x4xf32> -> vector<16x16x16xf32>
    %39 = vector.shape_cast %38 : vector<16x16x16xf32> to vector<256x16xf32>
    %c2 = arith.constant 2 : index
    %c0_22 = arith.constant 0 : index
    %c0_23 = arith.constant 0 : index
    %40 = vector.load %arg3[%c2, %c0_22, %c0_23] : memref<4x16x4xf32, #tpu.memory_space<vmem>>, vector<1x16x4xf32>
    %41 = vector.shape_cast %40 : vector<1x16x4xf32> to vector<16x4xf32>
    %cst_24 = arith.constant dense<0.000000e+00> : vector<256x4xf32>
    %42 = tpu.matmul %39, %41, %cst_24 {dimension_numbers = #tpu.dot_dimension_numbers<[1], [0], [0], [1], [0, 0, 1, 1], [], []>} : vector<256x16xf32>, vector<16x4xf32>, vector<256x4xf32> -> vector<256x4xf32>
    %43 = vector.shape_cast %3 : vector<4xf32> to vector<1x4xf32>
    %44 = vector.broadcast %43 : vector<1x4xf32> to vector<256x4xf32>
    %45 = arith.addf %42, %44 : vector<256x4xf32>
    %c0_25 = arith.constant 0 : index
    %c0_26 = arith.constant 0 : index
    %c2_27 = arith.constant 2 : index
    %c0_28 = arith.constant 0 : index
    %c0_29 = arith.constant 0 : index
    %46 = vector.load %arg5[%c0_25, %c0_26, %c2_27, %c0_28, %c0_29] : memref<1x1x4x256x4xf32, #tpu.memory_space<vmem>>, vector<1x1x1x256x4xf32>
    %47 = vector.shape_cast %46 : vector<1x1x1x256x4xf32> to vector<256x4xf32>
    %48 = vector.shape_cast %45 : vector<256x4xf32> to vector<1x1x1x256x4xf32>
    tpu.vector_store %arg5[%c0_25, %c0_26, %c2_27, %c0_28, %c0_29], %48 {strides = array<i32>} : memref<1x1x4x256x4xf32, #tpu.memory_space<vmem>>, vector<1x1x1x256x4xf32>,
    %49 = vector.extract_strided_slice %1 {offsets = [1, 1, 0], sizes = [16, 16, 4], strides = [1, 1, 1]} : vector<18x18x4xf32> to vector<16x16x4xf32>
    %50 = vector.extract_strided_slice %1 {offsets = [1, 2, 0], sizes = [16, 16, 4], strides = [1, 1, 1]} : vector<18x18x4xf32> to vector<16x16x4xf32>
    %51 = vector.extract_strided_slice %1 {offsets = [2, 1, 0], sizes = [16, 16, 4], strides = [1, 1, 1]} : vector<18x18x4xf32> to vector<16x16x4xf32>
    %52 = vector.extract_strided_slice %1 {offsets = [2, 2, 0], sizes = [16, 16, 4], strides = [1, 1, 1]} : vector<18x18x4xf32> to vector<16x16x4xf32>
    %53 = tpu.concatenate %49, %50, %51, %52 in 2 : vector<16x16x4xf32>, vector<16x16x4xf32>, vector<16x16x4xf32>, vector<16x16x4xf32> -> vector<16x16x16xf32>
    %54 = vector.shape_cast %53 : vector<16x16x16xf32> to vector<256x16xf32>
    %c3 = arith.constant 3 : index
    %c0_30 = arith.constant 0 : index
    %c0_31 = arith.constant 0 : index
    %55 = vector.load %arg3[%c3, %c0_30, %c0_31] : memref<4x16x4xf32, #tpu.memory_space<vmem>>, vector<1x16x4xf32>
    %56 = vector.shape_cast %55 : vector<1x16x4xf32> to vector<16x4xf32>
    %cst_32 = arith.constant dense<0.000000e+00> : vector<256x4xf32>
    %57 = tpu.matmul %54, %56, %cst_32 {dimension_numbers = #tpu.dot_dimension_numbers<[1], [0], [0], [1], [0, 0, 1, 1], [], []>} : vector<256x16xf32>, vector<16x4xf32>, vector<256x4xf32> -> vector<256x4xf32>
    %58 = vector.shape_cast %3 : vector<4xf32> to vector<1x4xf32>
    %59 = vector.broadcast %58 : vector<1x4xf32> to vector<256x4xf32>
    %60 = arith.addf %57, %59 : vector<256x4xf32>
    %c0_33 = arith.constant 0 : index
    %c0_34 = arith.constant 0 : index
    %c3_35 = arith.constant 3 : index
    %c0_36 = arith.constant 0 : index
    %c0_37 = arith.constant 0 : index
    %61 = vector.load %arg5[%c0_33, %c0_34, %c3_35, %c0_36, %c0_37] : memref<1x1x4x256x4xf32, #tpu.memory_space<vmem>>, vector<1x1x1x256x4xf32>
    %62 = vector.shape_cast %61 : vector<1x1x1x256x4xf32> to vector<256x4xf32>
    %63 = vector.shape_cast %60 : vector<256x4xf32> to vector<1x1x1x256x4xf32>
    tpu.vector_store %arg5[%c0_33, %c0_34, %c3_35, %c0_36, %c0_37], %63 {strides = array<i32>} : memref<1x1x4x256x4xf32, #tpu.memory_space<vmem>>, vector<1x1x1x256x4xf32>,
    return
  }
  func.func @transform_0(%arg0: i32, %arg1: i32) -> (i32, i32, i32, i32, i32) {
    %c0_i32 = arith.constant 0 : i32
    %c0_i32_0 = arith.constant 0 : i32
    %c0_i32_1 = arith.constant 0 : i32
    %c0_i32_2 = arith.constant 0 : i32
    return %arg0, %arg1, %c0_i32, %c0_i32_0, %c0_i32_1 : i32, i32, i32, i32, i32
  }
  func.func @transform_1(%arg0: i32, %arg1: i32) -> (i32, i32, i32) {
    %c0_i32 = arith.constant 0 : i32
    %c0_i32_0 = arith.constant 0 : i32
    %c0_i32_1 = arith.constant 0 : i32
    %c0_i32_2 = arith.constant 0 : i32
    return %c0_i32, %c0_i32_0, %c0_i32_1 : i32, i32, i32
  }
  func.func @transform_2(%arg0: i32, %arg1: i32) -> (i32, i32) {
    %c0_i32 = arith.constant 0 : i32
    %c0_i32_0 = arith.constant 0 : i32
    %c0_i32_1 = arith.constant 0 : i32
    return %c0_i32, %c0_i32_0 : i32, i32
  }
  func.func @transform_3(%arg0: i32, %arg1: i32) -> (i32, i32, i32, i32, i32) {
    %c0_i32 = arith.constant 0 : i32
    %c0_i32_0 = arith.constant 0 : i32
    %c0_i32_1 = arith.constant 0 : i32
    %c0_i32_2 = arith.constant 0 : i32
    return %arg0, %arg1, %c0_i32, %c0_i32_0, %c0_i32_1 : i32, i32, i32, i32, i32
  }
}

</mosaic_0001>

<llo_original>
// kernel: upsample_forward.1
$region0: #{upsample_forward.1}
  #allocation0 [shape = 'u32[]', space=smem, size = 0x4, offset = 0x4, fixed_abs, tag = 'smem constant byte address 0x4 - core index']
  #allocation1 [shape = 'u32[144,128]{1,0:T(1,128)}', space=vmem, size = 0x12000, scoped, tag = 'internal scratch']
  %s0 = inlined_call_operand.vmem [shape: f32[2,1,18,18,4], index: 0, kind: input, shape index: {}]
  %s1 = inlined_call_operand.vmem [shape: f32[4,16,4], index: 1, kind: input, shape index: {}]
  %s2 = inlined_call_operand.vmem [shape: f32[1,4], index: 2, kind: input, shape index: {}]
  %s3 = inlined_call_operand.vmem [shape: f32[2,1,4,256,4], index: 3, kind: output, shape index: {}]
  %s4 = sld [smem:[#allocation0]]
  $region45: #{upsample_forward.1} parent=0
    _
  %s6 = ssub.s32 1, %s4
  %s7 = scalar_select 0, %s6, %s4
  loop: start=0, step=1, limit=4
  $region2: #{upsample_forward.1} parent=0 // loop_pre_header
    _
  $region3: #{upsample_forward.1} parent=0 // loop_header
    %s9 = sphi 0, %s13
    %p10 = scmp.ge.s32.totalorder %s9, 4
    %s16 = sphi 0, %s28
    %s17 = sphi 0, %s24
    %s18 = sphi 0, %s16
    %s19 = sphi 0, %s17
    %s20 = sphi 0, %s18
    %s21 = sphi 0, %s19
    %s33 = sphi 0, %s35
    %s36 = sphi 0, %s33
    %s37 = sphi 0, %s36
    %s53 = sphi 0, %s37
    %s57 = sphi 0, %s57
    %s59 = sphi 0, %s57
    %s60 = sphi 0, %s59
    %s74 = sphi 0, %s60
    %s78 = sphi 0, %s78
    %s80 = sphi 0, %s78
    %s81 = sphi 0, %s80
    %s95 = sphi 0, %s81
    %s103 = sphi 0, %s105
    %s106 = sphi 0, %s103
    %s107 = sphi 0, %s106
    %s123 = sphi 0, %s107
  $region4: #{upsample_forward.1} parent=0 // loop_header_branch
    %12 = sbr.rel (%p10) target = $region8
  $region5: #{upsample_forward.1} parent=0 // loop_body
    %s14 = ssub.s32 %s9, 1
    %s15 = ssub.s32 %s9, 2
    %s22 = sadd.s32 1, %s17
    %p23 = scmp.ge.s32.totalorder %s22, 1
    %s24 = scalar_select %p23, 0, %s22
    %s25 = sadd.s32 1, %s16
    %s26 = scalar_select %p23, %s25, %s16
    %p27 = scmp.ge.s32.totalorder %s26, 2
    %s28 = scalar_select %p27, 0, %s26
    %s29 = ssub.s32 %s16, %s28
    %s30 = ssub.s32 %s17, %s24
    %s31 = sor.u32 %s29, %s30
    %p32 = scmp.eq.s32.totalorder %s31, 0
    %s34 = sadd.s32 %s33, 1
    %s35 = scalar_select %p32, %s33, %s34
    %p38 = pneg %p32
    %p39 = scmp.eq.s32.totalorder %s9, 1
    %p40 = por %p38, %p39
    %p41 = scmp.ne.s32.totalorder %s33, %s36
    %p42 = scmp.eq.s32.totalorder %s9, 0
    %p43 = por %p41, %p42
    %p44 = scmp.ne.s32.totalorder %s33, %s36
    %p45 = scmp.eq.s32.totalorder %s14, 1
    %p46 = por %p44, %p45
    %p47 = scmp.ne.s32.totalorder %s36, %s37
    %p48 = scmp.eq.s32.totalorder %s14, 0
    %p49 = por %p47, %p48
    %p50 = scmp.ne.s32.totalorder %s36, %s37
    %p51 = scmp.eq.s32.totalorder %s15, 1
    %p52 = por %p50, %p51
    %p54 = scmp.ne.s32.totalorder %s37, %s53
    %p55 = scmp.eq.s32.totalorder %s15, 0
    %p56 = por %p54, %p55
    %s58 = sadd.s32 %s57, 1
    %p61 = scmp.eq.s32.totalorder %s9, 1
    %p62 = scmp.ne.s32.totalorder %s57, %s59
    %p63 = scmp.eq.s32.totalorder %s9, 0
    %p64 = por %p62, %p63
    %p65 = scmp.ne.s32.totalorder %s57, %s59
    %p66 = scmp.eq.s32.totalorder %s14, 1
    %p67 = por %p65, %p66
    %p68 = scmp.ne.s32.totalorder %s59, %s60
    %p69 = scmp.eq.s32.totalorder %s14, 0
    %p70 = por %p68, %p69
    %p71 = scmp.ne.s32.totalorder %s59, %s60
    %p72 = scmp.eq.s32.totalorder %s15, 1
    %p73 = por %p71, %p72
    %p75 = scmp.ne.s32.totalorder %s60, %s74
    %p76 = scmp.eq.s32.totalorder %s15, 0
    %p77 = por %p75, %p76
    %s79 = sadd.s32 %s78, 1
    %p82 = scmp.eq.s32.totalorder %s9, 1
    %p83 = scmp.ne.s32.totalorder %s78, %s80
    %p84 = scmp.eq.s32.totalorder %s9, 0
    %p85 = por %p83, %p84
    %p86 = scmp.ne.s32.totalorder %s78, %s80
    %p87 = scmp.eq.s32.totalorder %s14, 1
    %p88 = por %p86, %p87
    %p89 = scmp.ne.s32.totalorder %s80, %s81
    %p90 = scmp.eq.s32.totalorder %s14, 0
    %p91 = por %p89, %p90
    %p92 = scmp.ne.s32.totalorder %s80, %s81
    %p93 = scmp.eq.s32.totalorder %s15, 1
    %p94 = por %p92, %p93
    %p96 = scmp.ne.s32.totalorder %s81, %s95
    %p97 = scmp.eq.s32.totalorder %s15, 0
    %p98 = por %p96, %p97
    %s99 = ssub.s32 %s16, %s28
    %s100 = ssub.s32 %s17, %s24
    %s101 = sor.u32 %s99, %s100
    %p102 = scmp.eq.s32.totalorder %s101, 0
    %s104 = sadd.s32 %s103, 1
    %s105 = scalar_select %p102, %s103, %s104
    %p108 = pneg %p102
    %p109 = scmp.eq.s32.totalorder %s9, 1
    %p110 = por %p108, %p109
    %p111 = scmp.ne.s32.totalorder %s103, %s106
    %p112 = scmp.eq.s32.totalorder %s9, 0
    %p113 = por %p111, %p112
    %p114 = scmp.ne.s32.totalorder %s103, %s106
    %p115 = scmp.eq.s32.totalorder %s14, 1
    %p116 = por %p114, %p115
    %p117 = scmp.ne.s32.totalorder %s106, %s107
    %p118 = scmp.eq.s32.totalorder %s14, 0
    %p119 = por %p117, %p118
    %p120 = scmp.ne.s32.totalorder %s106, %s107
    %p121 = scmp.eq.s32.totalorder %s15, 1
    %p122 = por %p120, %p121
    %p124 = scmp.ne.s32.totalorder %s107, %s123
    %p125 = scmp.eq.s32.totalorder %s15, 0
    %p126 = por %p124, %p125
    %p127 = scmp.le.s32.totalorder 1, %s9
    %p128 = scmp.lt.s32.totalorder %s9, 3
    %p129 = pnand %p127, %p128
    %p130 = pneg %p129
    // Predicated region
    $region9: #{upsample_forward.1} parent=5 // pred_check
      _
    $region10: #{upsample_forward.1} parent=5 // pred_check_branch
      %132 = sbr.rel (%p129) target = $region12
    $region11: #{upsample_forward.1} parent=5 // pred_region
      %s133 = ssub.s32 %s9, 1
      // Predicated region
      $region13: #{upsample_forward.1} parent=11 // pred_check
        %p134 = pneg %p70
      $region14: #{upsample_forward.1} parent=11 // pred_check_branch
        %136 = sbr.rel (%p134) target = $region16
      $region15: #{upsample_forward.1} parent=11 // pred_region
        _
      $region16: #{upsample_forward.1} parent=11 // pred_fallthru
        _
      // Predicated region
      $region17: #{upsample_forward.1} parent=11 // pred_check
        %p137 = pneg %p91
      $region18: #{upsample_forward.1} parent=11 // pred_check_branch
        %139 = sbr.rel (%p137) target = $region20
      $region19: #{upsample_forward.1} parent=11 // pred_region
        _
      $region20: #{upsample_forward.1} parent=11 // pred_fallthru
        _
    $region12: #{upsample_forward.1} parent=5 // pred_fallthru
      _
    %p140 = scmp.lt.s32.totalorder %s9, 2
    // Predicated region
    $region21: #{upsample_forward.1} parent=5 // pred_check
      %p141 = pneg %p140
    $region22: #{upsample_forward.1} parent=5 // pred_check_branch
      %143 = sbr.rel (%p141) target = $region24
    $region23: #{upsample_forward.1} parent=5 // pred_region
      // Predicated region
      $region25: #{upsample_forward.1} parent=23 // pred_check
        %p144 = pneg %p43
      $region26: #{upsample_forward.1} parent=23 // pred_check_branch
        %146 = sbr.rel (%p144) target = $region28
      $region27: #{upsample_forward.1} parent=23 // pred_region
        %p147 = scmp.lt.s32.totalorder %s16, 1
        %s148 = scalar_select %p147, %s16, 1
        %p149 = scmp.lt.s32.totalorder %s17, 0
        %s150 = scalar_select %p149, %s17, 0
        %s151 = smul.addr %s150, 54
        %s152 = smul.addr %s148, 54
        %s153 = sadd.s32 %s151, %s152
        %s154 = smul.addr %s153, 8
        %s155 = scalar_lea.vmem %s0, %s154
      $region28: #{upsample_forward.1} parent=23 // pred_fallthru
        _
    $region24: #{upsample_forward.1} parent=5 // pred_fallthru
      _
    %p156 = scmp.le.s32.totalorder 1, %s9
    %p157 = scmp.lt.s32.totalorder %s9, 3
    %p158 = pnand %p156, %p157
    %p159 = pneg %p158
    // Predicated region
    $region29: #{upsample_forward.1} parent=5 // pred_check
      _
    $region30: #{upsample_forward.1} parent=5 // pred_check_branch
      %161 = sbr.rel (%p158) target = $region32
    $region31: #{upsample_forward.1} parent=5 // pred_region
      %s162 = ssub.s32 %s9, 1
      %p163 = scmp.lt.s32.totalorder %s18, 1
      %s164 = scalar_select %p163, %s18, 1
      %p165 = scmp.lt.s32.totalorder %s19, 0
      %s166 = scalar_select %p165, %s19, 0
      %s167 = smul.addr %s166, 54
      %s168 = smul.addr %s164, 54
      %s169 = sadd.s32 %s167, %s168
      %s170 = smul.addr %s169, 8
      %s171 = scalar_lea.vmem %s0, %s170
      %p172 = pneg %p49
      %p173 = pneg %p46
      %p174 = pneg %p70
      %p175 = pneg %p67
      %p176 = pneg %p91
      %p177 = pneg %p88
      %p178 = pneg %p119
      %p179 = pneg %p116
      %p180 = scmp.lt.s32.totalorder %s18, 1
      %s181 = scalar_select %p180, %s18, 1
      %p182 = scmp.lt.s32.totalorder %s19, 0
      %s183 = scalar_select %p182, %s19, 0
      %s184 = smul.addr %s183, 128
      %s185 = smul.addr %s181, 128
      %s186 = sadd.s32 %s184, %s185
      %s187 = smul.addr %s186, 8
      %s188 = scalar_lea.vmem %s3, %s187
      %p189 = scmp.lt.s32.totalorder %s18, 1
      %s190 = scalar_select %p189, %s18, 1
      %p191 = scmp.lt.s32.totalorder %s19, 0
      %s192 = scalar_select %p191, %s19, 0
      %s193 = smul.addr %s192, 54
      %s194 = smul.addr %s190, 54
      %s195 = sadd.s32 %s193, %s194
      %s196 = smul.addr %s195, 8
      %s197 = scalar_lea.vmem %s0, %s196
      %p198 = scmp.lt.s32.totalorder %s18, 1
      %s199 = scalar_select %p198, %s18, 1
      %p200 = scmp.lt.s32.totalorder %s19, 0
      %s201 = scalar_select %p200, %s19, 0
      %s202 = smul.addr %s201, 128
      %s203 = smul.addr %s199, 128
      %s204 = sadd.s32 %s202, %s203
      %s205 = smul.addr %s204, 8
      %s206 = scalar_lea.vmem %s3, %s205
      %v207 = vld [vmem:[%s197] sm:$0xff]
      %v208 = vld [vmem:[%s197 + $0x8] sm:$0xff]
      %v209 = vld [vmem:[%s197 + $0x10] sm:$0x3]
      %v210 = vld [vmem:[%s197 + $0x18] sm:$0xff]
      %v211 = vld [vmem:[%s197 + $0x20] sm:$0xff]
      %v212 = vld [vmem:[%s197 + $0x28] sm:$0x3]
      %v213 = vld [vmem:[%s197 + $0x30] sm:$0xff]
      %v214 = vld [vmem:[%s197 + $0x38] sm:$0xff]
      %v215 = vld [vmem:[%s197 + $0x40] sm:$0x3]
      %v216 = vld [vmem:[%s197 + $0x48] sm:$0xff]
      %v217 = vld [vmem:[%s197 + $0x50] sm:$0xff]
      %v218 = vld [vmem:[%s197 + $0x58] sm:$0x3]
      %v219 = vld [vmem:[%s197 + $0x60] sm:$0xff]
      %v220 = vld [vmem:[%s197 + $0x68] sm:$0xff]
      %v221 = vld [vmem:[%s197 + $0x70] sm:$0x3]
      %v222 = vld [vmem:[%s197 + $0x78] sm:$0xff]
      %v223 = vld [vmem:[%s197 + $0x80] sm:$0xff]
      %v224 = vld [vmem:[%s197 + $0x88] sm:$0x3]
      %v225 = vld [vmem:[%s197 + $0x90] sm:$0xff]
      %v226 = vld [vmem:[%s197 + $0x98] sm:$0xff]
      %v227 = vld [vmem:[%s197 + $0xa0] sm:$0x3]
      %v228 = vld [vmem:[%s197 + $0xa8] sm:$0xff]
      %v229 = vld [vmem:[%s197 + $0xb0] sm:$0xff]
      %v230 = vld [vmem:[%s197 + $0xb8] sm:$0x3]
      %v231 = vld [vmem:[%s197 + $0xc0] sm:$0xff]
      %v232 = vld [vmem:[%s197 + $0xc8] sm:$0xff]
      %v233 = vld [vmem:[%s197 + $0xd0] sm:$0x3]
      %v234 = vld [vmem:[%s197 + $0xd8] sm:$0xff]
      %v235 = vld [vmem:[%s197 + $0xe0] sm:$0xff]
      %v236 = vld [vmem:[%s197 + $0xe8] sm:$0x3]
      %v237 = vld [vmem:[%s197 + $0xf0] sm:$0xff]
      %v238 = vld [vmem:[%s197 + $0xf8] sm:$0xff]
      %v239 = vld [vmem:[%s197 + $0x100] sm:$0x3]
      %v240 = vld [vmem:[%s197 + $0x108] sm:$0xff]
      %v241 = vld [vmem:[%s197 + $0x110] sm:$0xff]
      %v242 = vld [vmem:[%s197 + $0x118] sm:$0x3]
      %v243 = vld [vmem:[%s197 + $0x120] sm:$0xff]
      %v244 = vld [vmem:[%s197 + $0x128] sm:$0xff]
      %v245 = vld [vmem:[%s197 + $0x130] sm:$0x3]
      %v246 = vld [vmem:[%s197 + $0x138] sm:$0xff]
      %v247 = vld [vmem:[%s197 + $0x140] sm:$0xff]
      %v248 = vld [vmem:[%s197 + $0x148] sm:$0x3]
      %v249 = vld [vmem:[%s197 + $0x150] sm:$0xff]
      %v250 = vld [vmem:[%s197 + $0x158] sm:$0xff]
      %v251 = vld [vmem:[%s197 + $0x160] sm:$0x3]
      %v252 = vld [vmem:[%s197 + $0x168] sm:$0xff]
      %v253 = vld [vmem:[%s197 + $0x170] sm:$0xff]
      %v254 = vld [vmem:[%s197 + $0x178] sm:$0x3]
      %v255 = vld [vmem:[%s197 + $0x180] sm:$0xff]
      %v256 = vld [vmem:[%s197 + $0x188] sm:$0xff]
      %v257 = vld [vmem:[%s197 + $0x190] sm:$0x3]
      %v258 = vld [vmem:[%s197 + $0x198] sm:$0xff]
      %v259 = vld [vmem:[%s197 + $0x1a0] sm:$0xff]
      %v260 = vld [vmem:[%s197 + $0x1a8] sm:$0x3]
      %v261 = vld [vmem:[%s2] sm:$0x1]
      %vm310 = vcmask 1046528
      %v311 = vrot.slane %v207, 1
      %v312 = vrot.slane %v208, 1
      %v313 = vsel %vm310, %v311, %v312
      %v314 = vrot.slane %v209, 1
      %v315 = vsel %vm310, %v312, %v314
      %v316 = vrot.slane %v210, 1
      %v317 = vrot.slane %v211, 1
      %v318 = vsel %vm310, %v316, %v317
      %v319 = vrot.slane %v212, 1
      %v320 = vsel %vm310, %v317, %v319
      %v321 = vrot.slane %v213, 1
      %v322 = vrot.slane %v214, 1
      %v323 = vsel %vm310, %v321, %v322
      %v324 = vrot.slane %v215, 1
      %v325 = vsel %vm310, %v322, %v324
      %v326 = vrot.slane %v216, 1
      %v327 = vrot.slane %v217, 1
      %v328 = vsel %vm310, %v326, %v327
      %v329 = vrot.slane %v218, 1
      %v330 = vsel %vm310, %v327, %v329
      %v331 = vrot.slane %v219, 1
      %v332 = vrot.slane %v220, 1
      %v333 = vsel %vm310, %v331, %v332
      %v334 = vrot.slane %v221, 1
      %v335 = vsel %vm310, %v332, %v334
      %v336 = vrot.slane %v222, 1
      %v337 = vrot.slane %v223, 1
      %v338 = vsel %vm310, %v336, %v337
      %v339 = vrot.slane %v224, 1
      %v340 = vsel %vm310, %v337, %v339
      %v341 = vrot.slane %v225, 1
      %v342 = vrot.slane %v226, 1
      %v343 = vsel %vm310, %v341, %v342
      %v344 = vrot.slane %v227, 1
      %v345 = vsel %vm310, %v342, %v344
      %v346 = vrot.slane %v228, 1
      %v347 = vrot.slane %v229, 1
      %v348 = vsel %vm310, %v346, %v347
      %v349 = vrot.slane %v230, 1
      %v350 = vsel %vm310, %v347, %v349
      %v351 = vrot.slane %v231, 1
      %v352 = vrot.slane %v232, 1
      %v353 = vsel %vm310, %v351, %v352
      %v354 = vrot.slane %v233, 1
      %v355 = vsel %vm310, %v352, %v354
      %v356 = vrot.slane %v234, 1
      %v357 = vrot.slane %v235, 1
      %v358 = vsel %vm310, %v356, %v357
      %v359 = vrot.slane %v236, 1
      %v360 = vsel %vm310, %v357, %v359
      %v361 = vrot.slane %v237, 1
      %v362 = vrot.slane %v238, 1
      %v363 = vsel %vm310, %v361, %v362
      %v364 = vrot.slane %v239, 1
      %v365 = vsel %vm310, %v362, %v364
      %v366 = vrot.slane %v240, 1
      %v367 = vrot.slane %v241, 1
      %v368 = vsel %vm310, %v366, %v367
      %v369 = vrot.slane %v242, 1
      %v370 = vsel %vm310, %v367, %v369
      %v371 = vrot.slane %v243, 1
      %v372 = vrot.slane %v244, 1
      %v373 = vsel %vm310, %v371, %v372
      %v374 = vrot.slane %v245, 1
      %v375 = vsel %vm310, %v372, %v374
      %v376 = vrot.slane %v246, 1
      %v377 = vrot.slane %v247, 1
      %v378 = vsel %vm310, %v376, %v377
      %v379 = vrot.slane %v248, 1
      %v380 = vsel %vm310, %v377, %v379
      %v381 = vrot.slane %v249, 1
      %v382 = vrot.slane %v250, 1
      %v383 = vsel %vm310, %v381, %v382
      %v384 = vrot.slane %v251, 1
      %v385 = vsel %vm310, %v382, %v384
      %v386 = vrot.slane %v252, 1
      %v387 = vrot.slane %v253, 1
      %v388 = vsel %vm310, %v386, %v387
      %v389 = vrot.slane %v254, 1
      %v390 = vsel %vm310, %v387, %v389
      %391 = vrot.lane.b32.xlu0 %v313, 4
      %v392 = vpop.permute.xlu0 %391
      %393 = vrot.lane.b32.xlu0 %v315, 4
      %v394 = vpop.permute.xlu0 %393
      %395 = vrot.lane.b32.xlu0 %v318, 4
      %v396 = vpop.permute.xlu0 %395
      %397 = vrot.lane.b32.xlu0 %v320, 4
      %v398 = vpop.permute.xlu0 %397
      %399 = vrot.lane.b32.xlu0 %v323, 4
      %v400 = vpop.permute.xlu0 %399
      %401 = vrot.lane.b32.xlu0 %v325, 4
      %v402 = vpop.permute.xlu0 %401
      %403 = vrot.lane.b32.xlu0 %v328, 4
      %v404 = vpop.permute.xlu0 %403
      %405 = vrot.lane.b32.xlu0 %v330, 4
      %v406 = vpop.permute.xlu0 %405
      %407 = vrot.lane.b32.xlu0 %v333, 4
      %v408 = vpop.permute.xlu0 %407
      %409 = vrot.lane.b32.xlu0 %v335, 4
      %v410 = vpop.permute.xlu0 %409
      %411 = vrot.lane.b32.xlu0 %v338, 4
      %v412 = vpop.permute.xlu0 %411
      %413 = vrot.lane.b32.xlu0 %v340, 4
      %v414 = vpop.permute.xlu0 %413
      %415 = vrot.lane.b32.xlu0 %v343, 4
      %v416 = vpop.permute.xlu0 %415
      %417 = vrot.lane.b32.xlu0 %v345, 4
      %v418 = vpop.permute.xlu0 %417
      %419 = vrot.lane.b32.xlu0 %v348, 4
      %v420 = vpop.permute.xlu0 %419
      %421 = vrot.lane.b32.xlu0 %v350, 4
      %v422 = vpop.permute.xlu0 %421
      %423 = vrot.lane.b32.xlu0 %v353, 4
      %v424 = vpop.permute.xlu0 %423
      %425 = vrot.lane.b32.xlu0 %v355, 4
      %v426 = vpop.permute.xlu0 %425
      %427 = vrot.lane.b32.xlu0 %v358, 4
      %v428 = vpop.permute.xlu0 %427
      %429 = vrot.lane.b32.xlu0 %v360, 4
      %v430 = vpop.permute.xlu0 %429
      %431 = vrot.lane.b32.xlu0 %v363, 4
      %v432 = vpop.permute.xlu0 %431
      %433 = vrot.lane.b32.xlu0 %v365, 4
      %v434 = vpop.permute.xlu0 %433
      %435 = vrot.lane.b32.xlu0 %v368, 4
      %v436 = vpop.permute.xlu0 %435
      %437 = vrot.lane.b32.xlu0 %v370, 4
      %v438 = vpop.permute.xlu0 %437
      %439 = vrot.lane.b32.xlu0 %v373, 4
      %v440 = vpop.permute.xlu0 %439
      %441 = vrot.lane.b32.xlu0 %v375, 4
      %v442 = vpop.permute.xlu0 %441
      %443 = vrot.lane.b32.xlu0 %v378, 4
      %v444 = vpop.permute.xlu0 %443
      %445 = vrot.lane.b32.xlu0 %v380, 4
      %v446 = vpop.permute.xlu0 %445
      %447 = vrot.lane.b32.xlu0 %v383, 4
      %v448 = vpop.permute.xlu0 %447
      %449 = vrot.lane.b32.xlu0 %v385, 4
      %v450 = vpop.permute.xlu0 %449
      %451 = vrot.lane.b32.xlu0 %v388, 4
      %v452 = vpop.permute.xlu0 %451
      %453 = vrot.lane.b32.xlu0 %v390, 4
      %v454 = vpop.permute.xlu0 %453
      %489 = vrot.lane.b32.xlu0 %v210, 8
      %v490 = vpop.permute.xlu0 %489
      %491 = vrot.lane.b32.xlu0 %v211, 8
      %v492 = vpop.permute.xlu0 %491
      %493 = vrot.lane.b32.xlu0 %v213, 8
      %v494 = vpop.permute.xlu0 %493
      %495 = vrot.lane.b32.xlu0 %v214, 8
      %v496 = vpop.permute.xlu0 %495
      %497 = vrot.lane.b32.xlu0 %v216, 8
      %v498 = vpop.permute.xlu0 %497
      %499 = vrot.lane.b32.xlu0 %v217, 8
      %v500 = vpop.permute.xlu0 %499
      %501 = vrot.lane.b32.xlu0 %v219, 8
      %v502 = vpop.permute.xlu0 %501
      %503 = vrot.lane.b32.xlu0 %v220, 8
      %v504 = vpop.permute.xlu0 %503
      %505 = vrot.lane.b32.xlu0 %v222, 8
      %v506 = vpop.permute.xlu0 %505
      %507 = vrot.lane.b32.xlu0 %v223, 8
      %v508 = vpop.permute.xlu0 %507
      %509 = vrot.lane.b32.xlu0 %v225, 8
      %v510 = vpop.permute.xlu0 %509
      %511 = vrot.lane.b32.xlu0 %v226, 8
      %v512 = vpop.permute.xlu0 %511
      %513 = vrot.lane.b32.xlu0 %v228, 8
      %v514 = vpop.permute.xlu0 %513
      %515 = vrot.lane.b32.xlu0 %v229, 8
      %v516 = vpop.permute.xlu0 %515
      %517 = vrot.lane.b32.xlu0 %v231, 8
      %v518 = vpop.permute.xlu0 %517
      %519 = vrot.lane.b32.xlu0 %v232, 8
      %v520 = vpop.permute.xlu0 %519
      %521 = vrot.lane.b32.xlu0 %v234, 8
      %v522 = vpop.permute.xlu0 %521
      %523 = vrot.lane.b32.xlu0 %v235, 8
      %v524 = vpop.permute.xlu0 %523
      %525 = vrot.lane.b32.xlu0 %v237, 8
      %v526 = vpop.permute.xlu0 %525
      %527 = vrot.lane.b32.xlu0 %v238, 8
      %v528 = vpop.permute.xlu0 %527
      %529 = vrot.lane.b32.xlu0 %v240, 8
      %v530 = vpop.permute.xlu0 %529
      %531 = vrot.lane.b32.xlu0 %v241, 8
      %v532 = vpop.permute.xlu0 %531
      %533 = vrot.lane.b32.xlu0 %v243, 8
      %v534 = vpop.permute.xlu0 %533
      %535 = vrot.lane.b32.xlu0 %v244, 8
      %v536 = vpop.permute.xlu0 %535
      %537 = vrot.lane.b32.xlu0 %v246, 8
      %v538 = vpop.permute.xlu0 %537
      %539 = vrot.lane.b32.xlu0 %v247, 8
      %v540 = vpop.permute.xlu0 %539
      %541 = vrot.lane.b32.xlu0 %v249, 8
      %v542 = vpop.permute.xlu0 %541
      %543 = vrot.lane.b32.xlu0 %v250, 8
      %v544 = vpop.permute.xlu0 %543
      %545 = vrot.lane.b32.xlu0 %v252, 8
      %v546 = vpop.permute.xlu0 %545
      %547 = vrot.lane.b32.xlu0 %v253, 8
      %v548 = vpop.permute.xlu0 %547
      %549 = vrot.lane.b32.xlu0 %v255, 8
      %v550 = vpop.permute.xlu0 %549
      %551 = vrot.lane.b32.xlu0 %v256, 8
      %v552 = vpop.permute.xlu0 %551
      %v586 = vrot.slane %v255, 1
      %v587 = vrot.slane %v256, 1
      %v588 = vsel %vm310, %v586, %v587
      %v589 = vrot.slane %v257, 1
      %v590 = vsel %vm310, %v587, %v589
      %591 = vrot.lane.b32.xlu0 %v318, 12
      %v592 = vpop.permute.xlu0 %591
      %593 = vrot.lane.b32.xlu0 %v320, 12
      %v594 = vpop.permute.xlu0 %593
      %595 = vrot.lane.b32.xlu0 %v323, 12
      %v596 = vpop.permute.xlu0 %595
      %597 = vrot.lane.b32.xlu0 %v325, 12
      %v598 = vpop.permute.xlu0 %597
      %599 = vrot.lane.b32.xlu0 %v328, 12
      %v600 = vpop.permute.xlu0 %599
      %601 = vrot.lane.b32.xlu0 %v330, 12
      %v602 = vpop.permute.xlu0 %601
      %603 = vrot.lane.b32.xlu0 %v333, 12
      %v604 = vpop.permute.xlu0 %603
      %605 = vrot.lane.b32.xlu0 %v335, 12
      %v606 = vpop.permute.xlu0 %605
      %607 = vrot.lane.b32.xlu0 %v338, 12
      %v608 = vpop.permute.xlu0 %607
      %609 = vrot.lane.b32.xlu0 %v340, 12
      %v610 = vpop.permute.xlu0 %609
      %611 = vrot.lane.b32.xlu0 %v343, 12
      %v612 = vpop.permute.xlu0 %611
      %613 = vrot.lane.b32.xlu0 %v345, 12
      %v614 = vpop.permute.xlu0 %613
      %615 = vrot.lane.b32.xlu0 %v348, 12
      %v616 = vpop.permute.xlu0 %615
      %617 = vrot.lane.b32.xlu0 %v350, 12
      %v618 = vpop.permute.xlu0 %617
      %619 = vrot.lane.b32.xlu0 %v353, 12
      %v620 = vpop.permute.xlu0 %619
      %621 = vrot.lane.b32.xlu0 %v355, 12
      %v622 = vpop.permute.xlu0 %621
      %623 = vrot.lane.b32.xlu0 %v358, 12
      %v624 = vpop.permute.xlu0 %623
      %625 = vrot.lane.b32.xlu0 %v360, 12
      %v626 = vpop.permute.xlu0 %625
      %627 = vrot.lane.b32.xlu0 %v363, 12
      %v628 = vpop.permute.xlu0 %627
      %629 = vrot.lane.b32.xlu0 %v365, 12
      %v630 = vpop.permute.xlu0 %629
      %631 = vrot.lane.b32.xlu0 %v368, 12
      %v632 = vpop.permute.xlu0 %631
      %633 = vrot.lane.b32.xlu0 %v370, 12
      %v634 = vpop.permute.xlu0 %633
      %635 = vrot.lane.b32.xlu0 %v373, 12
      %v636 = vpop.permute.xlu0 %635
      %637 = vrot.lane.b32.xlu0 %v375, 12
      %v638 = vpop.permute.xlu0 %637
      %639 = vrot.lane.b32.xlu0 %v378, 12
      %v640 = vpop.permute.xlu0 %639
      %641 = vrot.lane.b32.xlu0 %v380, 12
      %v642 = vpop.permute.xlu0 %641
      %643 = vrot.lane.b32.xlu0 %v383, 12
      %v644 = vpop.permute.xlu0 %643
      %645 = vrot.lane.b32.xlu0 %v385, 12
      %v646 = vpop.permute.xlu0 %645
      %647 = vrot.lane.b32.xlu0 %v388, 12
      %v648 = vpop.permute.xlu0 %647
      %649 = vrot.lane.b32.xlu0 %v390, 12
      %v650 = vpop.permute.xlu0 %649
      %651 = vrot.lane.b32.xlu0 %v588, 12
      %v652 = vpop.permute.xlu0 %651
      %653 = vrot.lane.b32.xlu0 %v590, 12
      %v654 = vpop.permute.xlu0 %653
      %vm687 = vcmask 31744
      %v688 = vsel %vm687, %v207, %v392
      %v689 = vsel %vm687, %v208, %v394
      %v690 = vsel %vm687, %v210, %v396
      %v691 = vsel %vm687, %v211, %v398
      %v692 = vsel %vm687, %v213, %v400
      %v693 = vsel %vm687, %v214, %v402
      %v694 = vsel %vm687, %v216, %v404
      %v695 = vsel %vm687, %v217, %v406
      %v696 = vsel %vm687, %v219, %v408
      %v697 = vsel %vm687, %v220, %v410
      %v698 = vsel %vm687, %v222, %v412
      %v699 = vsel %vm687, %v223, %v414
      %v700 = vsel %vm687, %v225, %v416
      %v701 = vsel %vm687, %v226, %v418
      %v702 = vsel %vm687, %v228, %v420
      %v703 = vsel %vm687, %v229, %v422
      %v704 = vsel %vm687, %v231, %v424
      %v705 = vsel %vm687, %v232, %v426
      %v706 = vsel %vm687, %v234, %v428
      %v707 = vsel %vm687, %v235, %v430
      %v708 = vsel %vm687, %v237, %v432
      %v709 = vsel %vm687, %v238, %v434
      %v710 = vsel %vm687, %v240, %v436
      %v711 = vsel %vm687, %v241, %v438
      %v712 = vsel %vm687, %v243, %v440
      %v713 = vsel %vm687, %v244, %v442
      %v714 = vsel %vm687, %v246, %v444
      %v715 = vsel %vm687, %v247, %v446
      %v716 = vsel %vm687, %v249, %v448
      %v717 = vsel %vm687, %v250, %v450
      %v718 = vsel %vm687, %v252, %v452
      %v719 = vsel %vm687, %v253, %v454
      %vm720 = vcmask 64512
      %v721 = vsel %vm720, %v688, %v490
      %v722 = vsel %vm720, %v689, %v492
      %v723 = vsel %vm720, %v690, %v494
      %v724 = vsel %vm720, %v691, %v496
      %v725 = vsel %vm720, %v692, %v498
      %v726 = vsel %vm720, %v693, %v500
      %v727 = vsel %vm720, %v694, %v502
      %v728 = vsel %vm720, %v695, %v504
      %v729 = vsel %vm720, %v696, %v506
      %v730 = vsel %vm720, %v697, %v508
      %v731 = vsel %vm720, %v698, %v510
      %v732 = vsel %vm720, %v699, %v512
      %v733 = vsel %vm720, %v700, %v514
      %v734 = vsel %vm720, %v701, %v516
      %v735 = vsel %vm720, %v702, %v518
      %v736 = vsel %vm720, %v703, %v520
      %v737 = vsel %vm720, %v704, %v522
      %v738 = vsel %vm720, %v705, %v524
      %v739 = vsel %vm720, %v706, %v526
      %v740 = vsel %vm720, %v707, %v528
      %v741 = vsel %vm720, %v708, %v530
      %v742 = vsel %vm720, %v709, %v532
      %v743 = vsel %vm720, %v710, %v534
      %v744 = vsel %vm720, %v711, %v536
      %v745 = vsel %vm720, %v712, %v538
      %v746 = vsel %vm720, %v713, %v540
      %v747 = vsel %vm720, %v714, %v542
      %v748 = vsel %vm720, %v715, %v544
      %v749 = vsel %vm720, %v716, %v546
      %v750 = vsel %vm720, %v717, %v548
      %v751 = vsel %vm720, %v718, %v550
      %v752 = vsel %vm720, %v719, %v552
      %vm753 = vcmask 97280
      %v754 = vsel %vm753, %v721, %v592
      %v755 = vsel %vm753, %v722, %v594
      %v756 = vsel %vm753, %v723, %v596
      %v757 = vsel %vm753, %v724, %v598
      %v758 = vsel %vm753, %v725, %v600
      %v759 = vsel %vm753, %v726, %v602
      %v760 = vsel %vm753, %v727, %v604
      %v761 = vsel %vm753, %v728, %v606
      %v762 = vsel %vm753, %v729, %v608
      %v763 = vsel %vm753, %v730, %v610
      %v764 = vsel %vm753, %v731, %v612
      %v765 = vsel %vm753, %v732, %v614
      %v766 = vsel %vm753, %v733, %v616
      %v767 = vsel %vm753, %v734, %v618
      %v768 = vsel %vm753, %v735, %v620
      %v769 = vsel %vm753, %v736, %v622
      %v770 = vsel %vm753, %v737, %v624
      %v771 = vsel %vm753, %v738, %v626
      %v772 = vsel %vm753, %v739, %v628
      %v773 = vsel %vm753, %v740, %v630
      %v774 = vsel %vm753, %v741, %v632
      %v775 = vsel %vm753, %v742, %v634
      %v776 = vsel %vm753, %v743, %v636
      %v777 = vsel %vm753, %v744, %v638
      %v778 = vsel %vm753, %v745, %v640
      %v779 = vsel %vm753, %v746, %v642
      %v780 = vsel %vm753, %v747, %v644
      %v781 = vsel %vm753, %v748, %v646
      %v782 = vsel %vm753, %v749, %v648
      %v783 = vsel %vm753, %v750, %v650
      %v784 = vsel %vm753, %v751, %v652
      %v785 = vsel %vm753, %v752, %v654
      %v786 = vld [vmem:[%s1] sm:$0xff]
      %v787 = vld [vmem:[%s1 + $0x8] sm:$0xff]
      %v789 = vlaneseq
      %v790 = vshrl.u32 %v789, 7
      %v791 = vsub.s32 0, %v790
      %v792 = vrot.slane %v261, %v791
      %vm794 = vcmask 130048
      %v796 = vsel %vm794, %v754, 0
      %v799 = vsel %vm794, %v755, 0
      %v802 = vsel %vm794, %v756, 0
      %v805 = vsel %vm794, %v757, 0
      %v808 = vsel %vm794, %v758, 0
      %v811 = vsel %vm794, %v759, 0
      %v814 = vsel %vm794, %v760, 0
      %v817 = vsel %vm794, %v761, 0
      %v820 = vsel %vm794, %v762, 0
      %v823 = vsel %vm794, %v763, 0
      %v826 = vsel %vm794, %v764, 0
      %v829 = vsel %vm794, %v765, 0
      %v832 = vsel %vm794, %v766, 0
      %v835 = vsel %vm794, %v767, 0
      %v838 = vsel %vm794, %v768, 0
      %v841 = vsel %vm794, %v769, 0
      %v844 = vsel %vm794, %v770, 0
      %v847 = vsel %vm794, %v771, 0
      %v850 = vsel %vm794, %v772, 0
      %v853 = vsel %vm794, %v773, 0
      %v856 = vsel %vm794, %v774, 0
      %v859 = vsel %vm794, %v775, 0
      %v862 = vsel %vm794, %v776, 0
      %v865 = vsel %vm794, %v777, 0
      %v868 = vsel %vm794, %v778, 0
      %v871 = vsel %vm794, %v779, 0
      %v874 = vsel %vm794, %v780, 0
      %v877 = vsel %vm794, %v781, 0
      %v880 = vsel %vm794, %v782, 0
      %v883 = vsel %vm794, %v783, 0
      %v886 = vsel %vm794, %v784, 0
      %v889 = vsel %vm794, %v785, 0
      %891 = vmatprep.subr.mxu0 0.0
      %892 = vmatpush1.msra.mxu0 %v786
      %893 = vmatprep.subr.mxu0 0.0
      %894 = vmatpush1.msra.mxu0 %v787
      %895 = vmatprep.subr.mxu0 0.0
      %896 = vmatpush1.msra.mxu0 0.0
      %897 = vmatprep.subr.mxu0 0.0
      %898 = vmatpush1.msra.mxu0 0.0
      %899 = vmatprep.subr.mxu0 0.0
      %900 = vmatpush1.msra.mxu0 0.0
      %901 = vmatprep.subr.mxu0 0.0
      %902 = vmatpush1.msra.mxu0 0.0
      %903 = vmatprep.subr.mxu0 0.0
      %904 = vmatpush1.msra.mxu0 0.0
      %905 = vmatprep.subr.mxu0 0.0
      %906 = vmatpush1.msra.mxu0 0.0
      %907 = vmatprep.subr.mxu0 0.0
      %908 = vmatpush1.msra.mxu0 0.0
      %909 = vmatprep.subr.mxu0 0.0
      %910 = vmatpush1.msra.mxu0 0.0
      %911 = vmatprep.subr.mxu0 0.0
      %912 = vmatpush1.msra.mxu0 0.0
      %913 = vmatprep.subr.mxu0 0.0
      %914 = vmatpush1.msra.mxu0 0.0
      %915 = vmatprep.subr.mxu0 0.0
      %916 = vmatpush1.msra.mxu0 0.0
      %917 = vmatprep.subr.mxu0 0.0
      %918 = vmatpush1.msra.mxu0 0.0
      %919 = vmatprep.subr.mxu0 0.0
      %920 = vmatpush1.msra.mxu0 0.0
      %921 = vmatprep.subr.mxu0 0.0
      %922 = vmatpush1.msra.mxu0 0.0
      %923 = vmatprep.subr.mxu0 0.0
      %924 = vmatpush1.msra.mxu0 0.0
      %925 = vmatprep.subr.mxu0 0.0
      %926 = vmatpush1.msra.mxu0 0.0
      %927 = vmatprep.subr.mxu0 0.0
      %928 = vmatpush1.msra.mxu0 0.0
      %929 = vmatprep.subr.mxu0 0.0
      %930 = vmatpush1.msra.mxu0 0.0
      %931 = vmatprep.subr.mxu0 0.0
      %932 = vmatpush1.msra.mxu0 0.0
      %933 = vmatprep.subr.mxu0 0.0
      %934 = vmatpush1.msra.mxu0 0.0
      %935 = vmatprep.subr.mxu0 0.0
      %936 = vmatpush1.msra.mxu0 0.0
      %937 = vmatprep.subr.mxu0 0.0
      %938 = vmatpush1.msra.mxu0 0.0
      %939 = vmatprep.subr.mxu0 0.0
      %940 = vmatpush1.msra.mxu0 0.0
      %941 = vmatprep.subr.mxu0 0.0
      %942 = vmatpush1.msra.mxu0 0.0
      %943 = vmatprep.subr.mxu0 0.0
      %944 = vmatpush1.msra.mxu0 0.0
      %945 = vmatprep.subr.mxu0 0.0
      %946 = vmatpush1.msra.mxu0 0.0
      %947 = vmatprep.subr.mxu0 0.0
      %948 = vmatpush1.msra.mxu0 0.0
      %949 = vmatprep.subr.mxu0 0.0
      %950 = vmatpush1.msra.mxu0 0.0
      %951 = vmatprep.subr.mxu0 0.0
      %952 = vmatpush1.msra.mxu0 0.0
      %953 = vmatprep.subr.mxu0 0.0
      %954 = vmatpush1.msra.mxu0 0.0
      %955 = vmatprep.mubr.f32.mxu0 0.0
      %956 = vmatmul.mubr.f32.gmra.mrb[0].mxu0 %v796
      %v957 = vpop.f32.mrb[0].mxu0
      %v958 = vadd.f32 %v792, %v957
      %v959 = vpop.f32.mrb[0].mxu0
      %960 = vmatprep.mubr.f32.mxu0 0.0
      %961 = vmatmul.mubr.f32.gmra.mrb[0].mxu0 %v799
      %v962 = vpop.f32.mrb[0].mxu0
      %v963 = vadd.f32 %v792, %v962
      %v964 = vpop.f32.mrb[0].mxu0
      %965 = vmatprep.mubr.f32.mxu0 0.0
      %966 = vmatmul.mubr.f32.gmra.mrb[0].mxu0 %v802
      %v967 = vpop.f32.mrb[0].mxu0
      %v968 = vadd.f32 %v792, %v967
      %v969 = vpop.f32.mrb[0].mxu0
      %970 = vmatprep.mubr.f32.mxu0 0.0
      %971 = vmatmul.mubr.f32.gmra.mrb[0].mxu0 %v805
      %v972 = vpop.f32.mrb[0].mxu0
      %v973 = vadd.f32 %v792, %v972
      %v974 = vpop.f32.mrb[0].mxu0
      %975 = vmatprep.mubr.f32.mxu0 0.0
      %976 = vmatmul.mubr.f32.gmra.mrb[0].mxu0 %v808
      %v977 = vpop.f32.mrb[0].mxu0
      %v978 = vadd.f32 %v792, %v977
      %v979 = vpop.f32.mrb[0].mxu0
      %980 = vmatprep.mubr.f32.mxu0 0.0
      %981 = vmatmul.mubr.f32.gmra.mrb[0].mxu0 %v811
      %v982 = vpop.f32.mrb[0].mxu0
      %v983 = vadd.f32 %v792, %v982
      %v984 = vpop.f32.mrb[0].mxu0
      %985 = vmatprep.mubr.f32.mxu0 0.0
      %986 = vmatmul.mubr.f32.gmra.mrb[0].mxu0 %v814
      %v987 = vpop.f32.mrb[0].mxu0
      %v988 = vadd.f32 %v792, %v987
      %v989 = vpop.f32.mrb[0].mxu0
      %990 = vmatprep.mubr.f32.mxu0 0.0
      %991 = vmatmul.mubr.f32.gmra.mrb[0].mxu0 %v817
      %v992 = vpop.f32.mrb[0].mxu0
      %v993 = vadd.f32 %v792, %v992
      %v994 = vpop.f32.mrb[0].mxu0
      %995 = vmatprep.mubr.f32.mxu0 0.0
      %996 = vmatmul.mubr.f32.gmra.mrb[0].mxu0 %v820
      %v997 = vpop.f32.mrb[0].mxu0
      %v998 = vadd.f32 %v792, %v997
      %v999 = vpop.f32.mrb[0].mxu0
      %1000 = vmatprep.mubr.f32.mxu0 0.0
      %1001 = vmatmul.mubr.f32.gmra.mrb[0].mxu0 %v823
      %v1002 = vpop.f32.mrb[0].mxu0
      %v1003 = vadd.f32 %v792, %v1002
      %v1004 = vpop.f32.mrb[0].mxu0
      %1005 = vmatprep.mubr.f32.mxu0 0.0
      %1006 = vmatmul.mubr.f32.gmra.mrb[0].mxu0 %v826
      %v1007 = vpop.f32.mrb[0].mxu0
      %v1008 = vadd.f32 %v792, %v1007
      %v1009 = vpop.f32.mrb[0].mxu0
      %1010 = vmatprep.mubr.f32.mxu0 0.0
      %1011 = vmatmul.mubr.f32.gmra.mrb[0].mxu0 %v829
      %v1012 = vpop.f32.mrb[0].mxu0
      %v1013 = vadd.f32 %v792, %v1012
      %v1014 = vpop.f32.mrb[0].mxu0
      %1015 = vmatprep.mubr.f32.mxu0 0.0
      %1016 = vmatmul.mubr.f32.gmra.mrb[0].mxu0 %v832
      %v1017 = vpop.f32.mrb[0].mxu0
      %v1018 = vadd.f32 %v792, %v1017
      %v1019 = vpop.f32.mrb[0].mxu0
      %1020 = vmatprep.mubr.f32.mxu0 0.0
      %1021 = vmatmul.mubr.f32.gmra.mrb[0].mxu0 %v835
      %v1022 = vpop.f32.mrb[0].mxu0
      %v1023 = vadd.f32 %v792, %v1022
      %v1024 = vpop.f32.mrb[0].mxu0
      %1025 = vmatprep.mubr.f32.mxu0 0.0
      %1026 = vmatmul.mubr.f32.gmra.mrb[0].mxu0 %v838
      %v1027 = vpop.f32.mrb[0].mxu0
      %v1028 = vadd.f32 %v792, %v1027
      %v1029 = vpop.f32.mrb[0].mxu0
      %1030 = vmatprep.mubr.f32.mxu0 0.0
      %1031 = vmatmul.mubr.f32.gmra.mrb[0].mxu0 %v841
      %v1032 = vpop.f32.mrb[0].mxu0
      %v1033 = vadd.f32 %v792, %v1032
      %v1034 = vpop.f32.mrb[0].mxu0
      %1035 = vmatprep.mubr.f32.mxu0 0.0
      %1036 = vmatmul.mubr.f32.gmra.mrb[0].mxu0 %v844
      %v1037 = vpop.f32.mrb[0].mxu0
      %v1038 = vadd.f32 %v792, %v1037
      %v1039 = vpop.f32.mrb[0].mxu0
      %1040 = vmatprep.mubr.f32.mxu0 0.0
      %1041 = vmatmul.mubr.f32.gmra.mrb[0].mxu0 %v847
      %v1042 = vpop.f32.mrb[0].mxu0
      %v1043 = vadd.f32 %v792, %v1042
      %v1044 = vpop.f32.mrb[0].mxu0
      %1045 = vmatprep.mubr.f32.mxu0 0.0
      %1046 = vmatmul.mubr.f32.gmra.mrb[0].mxu0 %v850
      %v1047 = vpop.f32.mrb[0].mxu0
      %v1048 = vadd.f32 %v792, %v1047
      %v1049 = vpop.f32.mrb[0].mxu0
      %1050 = vmatprep.mubr.f32.mxu0 0.0
      %1051 = vmatmul.mubr.f32.gmra.mrb[0].mxu0 %v853
      %v1052 = vpop.f32.mrb[0].mxu0
      %v1053 = vadd.f32 %v792, %v1052
      %v1054 = vpop.f32.mrb[0].mxu0
      %1055 = vmatprep.mubr.f32.mxu0 0.0
      %1056 = vmatmul.mubr.f32.gmra.mrb[0].mxu0 %v856
      %v1057 = vpop.f32.mrb[0].mxu0
      %v1058 = vadd.f32 %v792, %v1057
      %v1059 = vpop.f32.mrb[0].mxu0
      %1060 = vmatprep.mubr.f32.mxu0 0.0
      %1061 = vmatmul.mubr.f32.gmra.mrb[0].mxu0 %v859
      %v1062 = vpop.f32.mrb[0].mxu0
      %v1063 = vadd.f32 %v792, %v1062
      %v1064 = vpop.f32.mrb[0].mxu0
      %1065 = vmatprep.mubr.f32.mxu0 0.0
      %1066 = vmatmul.mubr.f32.gmra.mrb[0].mxu0 %v862
      %v1067 = vpop.f32.mrb[0].mxu0
      %v1068 = vadd.f32 %v792, %v1067
      %v1069 = vpop.f32.mrb[0].mxu0
      %1070 = vmatprep.mubr.f32.mxu0 0.0
      %1071 = vmatmul.mubr.f32.gmra.mrb[0].mxu0 %v865
      %v1072 = vpop.f32.mrb[0].mxu0
      %v1073 = vadd.f32 %v792, %v1072
      %v1074 = vpop.f32.mrb[0].mxu0
      %1075 = vmatprep.mubr.f32.mxu0 0.0
      %1076 = vmatmul.mubr.f32.gmra.mrb[0].mxu0 %v868
      %v1077 = vpop.f32.mrb[0].mxu0
      %v1078 = vadd.f32 %v792, %v1077
      %v1079 = vpop.f32.mrb[0].mxu0
      %1080 = vmatprep.mubr.f32.mxu0 0.0
      %1081 = vmatmul.mubr.f32.gmra.mrb[0].mxu0 %v871
      %v1082 = vpop.f32.mrb[0].mxu0
      %v1083 = vadd.f32 %v792, %v1082
      %v1084 = vpop.f32.mrb[0].mxu0
      %1085 = vmatprep.mubr.f32.mxu0 0.0
      %1086 = vmatmul.mubr.f32.gmra.mrb[0].mxu0 %v874
      %v1087 = vpop.f32.mrb[0].mxu0
      %v1088 = vadd.f32 %v792, %v1087
      %v1089 = vpop.f32.mrb[0].mxu0
      %1090 = vmatprep.mubr.f32.mxu0 0.0
      %1091 = vmatmul.mubr.f32.gmra.mrb[0].mxu0 %v877
      %v1092 = vpop.f32.mrb[0].mxu0
      %v1093 = vadd.f32 %v792, %v1092
      %v1094 = vpop.f32.mrb[0].mxu0
      %1095 = vmatprep.mubr.f32.mxu0 0.0
      %1096 = vmatmul.mubr.f32.gmra.mrb[0].mxu0 %v880
      %v1097 = vpop.f32.mrb[0].mxu0
      %v1098 = vadd.f32 %v792, %v1097
      %v1099 = vpop.f32.mrb[0].mxu0
      %1100 = vmatprep.mubr.f32.mxu0 0.0
      %1101 = vmatmul.mubr.f32.gmra.mrb[0].mxu0 %v883
      %v1102 = vpop.f32.mrb[0].mxu0
      %v1103 = vadd.f32 %v792, %v1102
      %v1104 = vpop.f32.mrb[0].mxu0
      %1105 = vmatprep.mubr.f32.mxu0 0.0
      %1106 = vmatmul.mubr.f32.gmra.mrb[0].mxu0 %v886
      %v1107 = vpop.f32.mrb[0].mxu0
      %v1108 = vadd.f32 %v792, %v1107
      %v1109 = vpop.f32.mrb[0].mxu0
      %1110 = vmatprep.mubr.f32.mxu0 0.0
      %1111 = vmatmul.mubr.f32.gmra.mrb[0].mxu0 %v889
      %v1112 = vpop.f32.mrb[0].mxu0
      %v1113 = vadd.f32 %v792, %v1112
      %v1114 = vpop.f32.mrb[0].mxu0
      %1115 = vdwg.mxu0
      %1116 = vst.msk [vmem:[%s206] sm:$0xff] %vm687, %v958
      %1117 = vst.msk [vmem:[%s206 + $0x8] sm:$0xff] %vm687, %v963
      %1118 = vst.msk [vmem:[%s206 + $0x10] sm:$0xff] %vm687, %v968
      %1119 = vst.msk [vmem:[%s206 + $0x18] sm:$0xff] %vm687, %v973
      %1120 = vst.msk [vmem:[%s206 + $0x20] sm:$0xff] %vm687, %v978
      %1121 = vst.msk [vmem:[%s206 + $0x28] sm:$0xff] %vm687, %v983
      %1122 = vst.msk [vmem:[%s206 + $0x30] sm:$0xff] %vm687, %v988
      %1123 = vst.msk [vmem:[%s206 + $0x38] sm:$0xff] %vm687, %v993
      %1124 = vst.msk [vmem:[%s206 + $0x40] sm:$0xff] %vm687, %v998
      %1125 = vst.msk [vmem:[%s206 + $0x48] sm:$0xff] %vm687, %v1003
      %1126 = vst.msk [vmem:[%s206 + $0x50] sm:$0xff] %vm687, %v1008
      %1127 = vst.msk [vmem:[%s206 + $0x58] sm:$0xff] %vm687, %v1013
      %1128 = vst.msk [vmem:[%s206 + $0x60] sm:$0xff] %vm687, %v1018
      %1129 = vst.msk [vmem:[%s206 + $0x68] sm:$0xff] %vm687, %v1023
      %1130 = vst.msk [vmem:[%s206 + $0x70] sm:$0xff] %vm687, %v1028
      %1131 = vst.msk [vmem:[%s206 + $0x78] sm:$0xff] %vm687, %v1033
      %1132 = vst.msk [vmem:[%s206 + $0x80] sm:$0xff] %vm687, %v1038
      %1133 = vst.msk [vmem:[%s206 + $0x88] sm:$0xff] %vm687, %v1043
      %1134 = vst.msk [vmem:[%s206 + $0x90] sm:$0xff] %vm687, %v1048
      %1135 = vst.msk [vmem:[%s206 + $0x98] sm:$0xff] %vm687, %v1053
      %1136 = vst.msk [vmem:[%s206 + $0xa0] sm:$0xff] %vm687, %v1058
      %1137 = vst.msk [vmem:[%s206 + $0xa8] sm:$0xff] %vm687, %v1063
      %1138 = vst.msk [vmem:[%s206 + $0xb0] sm:$0xff] %vm687, %v1068
      %1139 = vst.msk [vmem:[%s206 + $0xb8] sm:$0xff] %vm687, %v1073
      %1140 = vst.msk [vmem:[%s206 + $0xc0] sm:$0xff] %vm687, %v1078
      %1141 = vst.msk [vmem:[%s206 + $0xc8] sm:$0xff] %vm687, %v1083
      %1142 = vst.msk [vmem:[%s206 + $0xd0] sm:$0xff] %vm687, %v1088
      %1143 = vst.msk [vmem:[%s206 + $0xd8] sm:$0xff] %vm687, %v1093
      %1144 = vst.msk [vmem:[%s206 + $0xe0] sm:$0xff] %vm687, %v1098
      %1145 = vst.msk [vmem:[%s206 + $0xe8] sm:$0xff] %vm687, %v1103
      %1146 = vst.msk [vmem:[%s206 + $0xf0] sm:$0xff] %vm687, %v1108
      %1147 = vst.msk [vmem:[%s206 + $0xf8] sm:$0xff] %vm687, %v1113
      %1148 = vrot.lane.b32.xlu0 %v314, 4
      %v1149 = vpop.permute.xlu0 %1148
      %1150 = vrot.lane.b32.xlu0 %v319, 4
      %v1151 = vpop.permute.xlu0 %1150
      %1152 = vrot.lane.b32.xlu0 %v324, 4
      %v1153 = vpop.permute.xlu0 %1152
      %1154 = vrot.lane.b32.xlu0 %v329, 4
      %v1155 = vpop.permute.xlu0 %1154
      %1156 = vrot.lane.b32.xlu0 %v334, 4
      %v1157 = vpop.permute.xlu0 %1156
      %1158 = vrot.lane.b32.xlu0 %v339, 4
      %v1159 = vpop.permute.xlu0 %1158
      %1160 = vrot.lane.b32.xlu0 %v344, 4
      %v1161 = vpop.permute.xlu0 %1160
      %1162 = vrot.lane.b32.xlu0 %v349, 4
      %v1163 = vpop.permute.xlu0 %1162
      %1164 = vrot.lane.b32.xlu0 %v354, 4
      %v1165 = vpop.permute.xlu0 %1164
      %1166 = vrot.lane.b32.xlu0 %v359, 4
      %v1167 = vpop.permute.xlu0 %1166
      %1168 = vrot.lane.b32.xlu0 %v364, 4
      %v1169 = vpop.permute.xlu0 %1168
      %1170 = vrot.lane.b32.xlu0 %v369, 4
      %v1171 = vpop.permute.xlu0 %1170
      %1172 = vrot.lane.b32.xlu0 %v374, 4
      %v1173 = vpop.permute.xlu0 %1172
      %1174 = vrot.lane.b32.xlu0 %v379, 4
      %v1175 = vpop.permute.xlu0 %1174
      %1176 = vrot.lane.b32.xlu0 %v384, 4
      %v1177 = vpop.permute.xlu0 %1176
      %1178 = vrot.lane.b32.xlu0 %v389, 4
      %v1179 = vpop.permute.xlu0 %1178
      %1196 = vrot.lane.b32.xlu0 %v212, 8
      %v1197 = vpop.permute.xlu0 %1196
      %1198 = vrot.lane.b32.xlu0 %v215, 8
      %v1199 = vpop.permute.xlu0 %1198
      %1200 = vrot.lane.b32.xlu0 %v218, 8
      %v1201 = vpop.permute.xlu0 %1200
      %1202 = vrot.lane.b32.xlu0 %v221, 8
      %v1203 = vpop.permute.xlu0 %1202
      %1204 = vrot.lane.b32.xlu0 %v224, 8
      %v1205 = vpop.permute.xlu0 %1204
      %1206 = vrot.lane.b32.xlu0 %v227, 8
      %v1207 = vpop.permute.xlu0 %1206
      %1208 = vrot.lane.b32.xlu0 %v230, 8
      %v1209 = vpop.permute.xlu0 %1208
      %1210 = vrot.lane.b32.xlu0 %v233, 8
      %v1211 = vpop.permute.xlu0 %1210
      %1212 = vrot.lane.b32.xlu0 %v236, 8
      %v1213 = vpop.permute.xlu0 %1212
      %1214 = vrot.lane.b32.xlu0 %v239, 8
      %v1215 = vpop.permute.xlu0 %1214
      %1216 = vrot.lane.b32.xlu0 %v242, 8
      %v1217 = vpop.permute.xlu0 %1216
      %1218 = vrot.lane.b32.xlu0 %v245, 8
      %v1219 = vpop.permute.xlu0 %1218
      %1220 = vrot.lane.b32.xlu0 %v248, 8
      %v1221 = vpop.permute.xlu0 %1220
      %1222 = vrot.lane.b32.xlu0 %v251, 8
      %v1223 = vpop.permute.xlu0 %1222
      %1224 = vrot.lane.b32.xlu0 %v254, 8
      %v1225 = vpop.permute.xlu0 %1224
      %1226 = vrot.lane.b32.xlu0 %v257, 8
      %v1227 = vpop.permute.xlu0 %1226
      %1244 = vrot.lane.b32.xlu0 %v319, 12
      %v1245 = vpop.permute.xlu0 %1244
      %1246 = vrot.lane.b32.xlu0 %v324, 12
      %v1247 = vpop.permute.xlu0 %1246
      %1248 = vrot.lane.b32.xlu0 %v329, 12
      %v1249 = vpop.permute.xlu0 %1248
      %1250 = vrot.lane.b32.xlu0 %v334, 12
      %v1251 = vpop.permute.xlu0 %1250
      %1252 = vrot.lane.b32.xlu0 %v339, 12
      %v1253 = vpop.permute.xlu0 %1252
      %1254 = vrot.lane.b32.xlu0 %v344, 12
      %v1255 = vpop.permute.xlu0 %1254
      %1256 = vrot.lane.b32.xlu0 %v349, 12
      %v1257 = vpop.permute.xlu0 %1256
      %1258 = vrot.lane.b32.xlu0 %v354, 12
      %v1259 = vpop.permute.xlu0 %1258
      %1260 = vrot.lane.b32.xlu0 %v359, 12
      %v1261 = vpop.permute.xlu0 %1260
      %1262 = vrot.lane.b32.xlu0 %v364, 12
      %v1263 = vpop.permute.xlu0 %1262
      %1264 = vrot.lane.b32.xlu0 %v369, 12
      %v1265 = vpop.permute.xlu0 %1264
      %1266 = vrot.lane.b32.xlu0 %v374, 12
      %v1267 = vpop.permute.xlu0 %1266
      %1268 = vrot.lane.b32.xlu0 %v379, 12
      %v1269 = vpop.permute.xlu0 %1268
      %1270 = vrot.lane.b32.xlu0 %v384, 12
      %v1271 = vpop.permute.xlu0 %1270
      %1272 = vrot.lane.b32.xlu0 %v389, 12
      %v1273 = vpop.permute.xlu0 %1272
      %1274 = vrot.lane.b32.xlu0 %v589, 12
      %v1275 = vpop.permute.xlu0 %1274
      %v1292 = vsel %vm687, %v209, %v1149
      %v1293 = vsel %vm687, %v212, %v1151
      %v1294 = vsel %vm687, %v215, %v1153
      %v1295 = vsel %vm687, %v218, %v1155
      %v1296 = vsel %vm687, %v221, %v1157
      %v1297 = vsel %vm687, %v224, %v1159
      %v1298 = vsel %vm687, %v227, %v1161
      %v1299 = vsel %vm687, %v230, %v1163
      %v1300 = vsel %vm687, %v233, %v1165
      %v1301 = vsel %vm687, %v236, %v1167
      %v1302 = vsel %vm687, %v239, %v1169
      %v1303 = vsel %vm687, %v242, %v1171
      %v1304 = vsel %vm687, %v245, %v1173
      %v1305 = vsel %vm687, %v248, %v1175
      %v1306 = vsel %vm687, %v251, %v1177
      %v1307 = vsel %vm687, %v254, %v1179
      %v1308 = vsel %vm720, %v1292, %v1197
      %v1309 = vsel %vm720, %v1293, %v1199
      %v1310 = vsel %vm720, %v1294, %v1201
      %v1311 = vsel %vm720, %v1295, %v1203
      %v1312 = vsel %vm720, %v1296, %v1205
      %v1313 = vsel %vm720, %v1297, %v1207
      %v1314 = vsel %vm720, %v1298, %v1209
      %v1315 = vsel %vm720, %v1299, %v1211
      %v1316 = vsel %vm720, %v1300, %v1213
      %v1317 = vsel %vm720, %v1301, %v1215
      %v1318 = vsel %vm720, %v1302, %v1217
      %v1319 = vsel %vm720, %v1303, %v1219
      %v1320 = vsel %vm720, %v1304, %v1221
      %v1321 = vsel %vm720, %v1305, %v1223
      %v1322 = vsel %vm720, %v1306, %v1225
      %v1323 = vsel %vm720, %v1307, %v1227
      %v1324 = vsel %vm753, %v1308, %v1245
      %v1325 = vsel %vm753, %v1309, %v1247
      %v1326 = vsel %vm753, %v1310, %v1249
      %v1327 = vsel %vm753, %v1311, %v1251
      %v1328 = vsel %vm753, %v1312, %v1253
      %v1329 = vsel %vm753, %v1313, %v1255
      %v1330 = vsel %vm753, %v1314, %v1257
      %v1331 = vsel %vm753, %v1315, %v1259
      %v1332 = vsel %vm753, %v1316, %v1261
      %v1333 = vsel %vm753, %v1317, %v1263
      %v1334 = vsel %vm753, %v1318, %v1265
      %v1335 = vsel %vm753, %v1319, %v1267
      %v1336 = vsel %vm753, %v1320, %v1269
      %v1337 = vsel %vm753, %v1321, %v1271
      %v1338 = vsel %vm753, %v1322, %v1273
      %v1339 = vsel %vm753, %v1323, %v1275
      %v1356 = vrot.slane %v754, 1
      %v1357 = vrot.slane %v755, 1
      %v1358 = vsel %vm310, %v1356, %v1357
      %v1359 = vrot.slane %v1324, 1
      %v1360 = vsel %vm310, %v1357, %v1359
      %v1361 = vrot.slane %v756, 1
      %v1362 = vrot.slane %v757, 1
      %v1363 = vsel %vm310, %v1361, %v1362
      %v1364 = vrot.slane %v1325, 1
      %v1365 = vsel %vm310, %v1362, %v1364
      %v1366 = vrot.slane %v758, 1
      %v1367 = vrot.slane %v759, 1
      %v1368 = vsel %vm310, %v1366, %v1367
      %v1369 = vrot.slane %v1326, 1
      %v1370 = vsel %vm310, %v1367, %v1369
      %v1371 = vrot.slane %v760, 1
      %v1372 = vrot.slane %v761, 1
      %v1373 = vsel %vm310, %v1371, %v1372
      %v1374 = vrot.slane %v1327, 1
      %v1375 = vsel %vm310, %v1372, %v1374
      %v1376 = vrot.slane %v762, 1
      %v1377 = vrot.slane %v763, 1
      %v1378 = vsel %vm310, %v1376, %v1377
      %v1379 = vrot.slane %v1328, 1
      %v1380 = vsel %vm310, %v1377, %v1379
      %v1381 = vrot.slane %v764, 1
      %v1382 = vrot.slane %v765, 1
      %v1383 = vsel %vm310, %v1381, %v1382
      %v1384 = vrot.slane %v1329, 1
      %v1385 = vsel %vm310, %v1382, %v1384
      %v1386 = vrot.slane %v766, 1
      %v1387 = vrot.slane %v767, 1
      %v1388 = vsel %vm310, %v1386, %v1387
      %v1389 = vrot.slane %v1330, 1
      %v1390 = vsel %vm310, %v1387, %v1389
      %v1391 = vrot.slane %v768, 1
      %v1392 = vrot.slane %v769, 1
      %v1393 = vsel %vm310, %v1391, %v1392
      %v1394 = vrot.slane %v1331, 1
      %v1395 = vsel %vm310, %v1392, %v1394
      %v1396 = vrot.slane %v770, 1
      %v1397 = vrot.slane %v771, 1
      %v1398 = vsel %vm310, %v1396, %v1397
      %v1399 = vrot.slane %v1332, 1
      %v1400 = vsel %vm310, %v1397, %v1399
      %v1401 = vrot.slane %v772, 1
      %v1402 = vrot.slane %v773, 1
      %v1403 = vsel %vm310, %v1401, %v1402
      %v1404 = vrot.slane %v1333, 1
      %v1405 = vsel %vm310, %v1402, %v1404
      %v1406 = vrot.slane %v774, 1
      %v1407 = vrot.slane %v775, 1
      %v1408 = vsel %vm310, %v1406, %v1407
      %v1409 = vrot.slane %v1334, 1
      %v1410 = vsel %vm310, %v1407, %v1409
      %v1411 = vrot.slane %v776, 1
      %v1412 = vrot.slane %v777, 1
      %v1413 = vsel %vm310, %v1411, %v1412
      %v1414 = vrot.slane %v1335, 1
      %v1415 = vsel %vm310, %v1412, %v1414
      %v1416 = vrot.slane %v778, 1
      %v1417 = vrot.slane %v779, 1
      %v1418 = vsel %vm310, %v1416, %v1417
      %v1419 = vrot.slane %v1336, 1
      %v1420 = vsel %vm310, %v1417, %v1419
      %v1421 = vrot.slane %v780, 1
      %v1422 = vrot.slane %v781, 1
      %v1423 = vsel %vm310, %v1421, %v1422
      %v1424 = vrot.slane %v1337, 1
      %v1425 = vsel %vm310, %v1422, %v1424
      %v1426 = vrot.slane %v782, 1
      %v1427 = vrot.slane %v783, 1
      %v1428 = vsel %vm310, %v1426, %v1427
      %v1429 = vrot.slane %v1338, 1
      %v1430 = vsel %vm310, %v1427, %v1429
      %v1431 = vrot.slane %v784, 1
      %v1432 = vrot.slane %v785, 1
      %v1433 = vsel %vm310, %v1431, %v1432
      %v1434 = vrot.slane %v1339, 1
      %v1435 = vsel %vm310, %v1432, %v1434
      %s1436 = scalar_lea.vmem %s1, 16
      %v1437 = vld [vmem:[%s1436] sm:$0xff]
      %v1438 = vld [vmem:[%s1436 + $0x8] sm:$0xff]
      %v1439 = vsel %vm794, %v1358, 0
      %v1441 = vsel %vm794, %v1360, 0
      %v1443 = vsel %vm794, %v1363, 0
      %v1445 = vsel %vm794, %v1365, 0
      %v1447 = vsel %vm794, %v1368, 0
      %v1449 = vsel %vm794, %v1370, 0
      %v1451 = vsel %vm794, %v1373, 0
      %v1453 = vsel %vm794, %v1375, 0
      %v1455 = vsel %vm794, %v1378, 0
      %v1457 = vsel %vm794, %v1380, 0
      %v1459 = vsel %vm794, %v1383, 0
      %v1461 = vsel %vm794, %v1385, 0
      %v1463 = vsel %vm794, %v1388, 0
      %v1465 = vsel %vm794, %v1390, 0
      %v1467 = vsel %vm794, %v1393, 0
      %v1469 = vsel %vm794, %v1395, 0
      %v1471 = vsel %vm794, %v1398, 0
      %v1473 = vsel %vm794, %v1400, 0
      %v1475 = vsel %vm794, %v1403, 0
      %v1477 = vsel %vm794, %v1405, 0
      %v1479 = vsel %vm794, %v1408, 0
      %v1481 = vsel %vm794, %v1410, 0
      %v1483 = vsel %vm794, %v1413, 0
      %v1485 = vsel %vm794, %v1415, 0
      %v1487 = vsel %vm794, %v1418, 0
      %v1489 = vsel %vm794, %v1420, 0
      %v1491 = vsel %vm794, %v1423, 0
      %v1493 = vsel %vm794, %v1425, 0
      %v1495 = vsel %vm794, %v1428, 0
      %v1497 = vsel %vm794, %v1430, 0
      %v1499 = vsel %vm794, %v1433, 0
      %v1501 = vsel %vm794, %v1435, 0
      %1503 = vmatprep.subr.mxu0 0.0
      %1504 = vmatpush1.msra.mxu0 %v1437
      %1505 = vmatprep.subr.mxu0 0.0
      %1506 = vmatpush1.msra.mxu0 %v1438
      %1507 = vmatprep.subr.mxu0 0.0
      %1508 = vmatpush1.msra.mxu0 0.0
      %1509 = vmatprep.subr.mxu0 0.0
      %1510 = vmatpush1.msra.mxu0 0.0
      %1511 = vmatprep.subr.mxu0 0.0
      %1512 = vmatpush1.msra.mxu0 0.0
      %1513 = vmatprep.subr.mxu0 0.0
      %1514 = vmatpush1.msra.mxu0 0.0
      %1515 = vmatprep.subr.mxu0 0.0
      %1516 = vmatpush1.msra.mxu0 0.0
      %1517 = vmatprep.subr.mxu0 0.0
      %1518 = vmatpush1.msra.mxu0 0.0
      %1519 = vmatprep.subr.mxu0 0.0
      %1520 = vmatpush1.msra.mxu0 0.0
      %1521 = vmatprep.subr.mxu0 0.0
      %1522 = vmatpush1.msra.mxu0 0.0
      %1523 = vmatprep.subr.mxu0 0.0
      %1524 = vmatpush1.msra.mxu0 0.0
      %1525 = vmatprep.subr.mxu0 0.0
      %1526 = vmatpush1.msra.mxu0 0.0
      %1527 = vmatprep.subr.mxu0 0.0
      %1528 = vmatpush1.msra.mxu0 0.0
      %1529 = vmatprep.subr.mxu0 0.0
      %1530 = vmatpush1.msra.mxu0 0.0
      %1531 = vmatprep.subr.mxu0 0.0
      %1532 = vmatpush1.msra.mxu0 0.0
      %1533 = vmatprep.subr.mxu0 0.0
      %1534 = vmatpush1.msra.mxu0 0.0
      %1535 = vmatprep.subr.mxu0 0.0
      %1536 = vmatpush1.msra.mxu0 0.0
      %1537 = vmatprep.subr.mxu0 0.0
      %1538 = vmatpush1.msra.mxu0 0.0
      %1539 = vmatprep.subr.mxu0 0.0
      %1540 = vmatpush1.msra.mxu0 0.0
      %1541 = vmatprep.subr.mxu0 0.0
      %1542 = vmatpush1.msra.mxu0 0.0
      %1543 = vmatprep.subr.mxu0 0.0
      %1544 = vmatpush1.msra.mxu0 0.0
      %1545 = vmatprep.subr.mxu0 0.0
      %1546 = vmatpush1.msra.mxu0 0.0
      %1547 = vmatprep.subr.mxu0 0.0
      %1548 = vmatpush1.msra.mxu0 0.0
      %1549 = vmatprep.subr.mxu0 0.0
      %1550 = vmatpush1.msra.mxu0 0.0
      %1551 = vmatprep.subr.mxu0 0.0
      %1552 = vmatpush1.msra.mxu0 0.0
      %1553 = vmatprep.subr.mxu0 0.0
      %1554 = vmatpush1.msra.mxu0 0.0
      %1555 = vmatprep.subr.mxu0 0.0
      %1556 = vmatpush1.msra.mxu0 0.0
      %1557 = vmatprep.subr.mxu0 0.0
      %1558 = vmatpush1.msra.mxu0 0.0
      %1559 = vmatprep.subr.mxu0 0.0
      %1560 = vmatpush1.msra.mxu0 0.0
      %1561 = vmatprep.subr.mxu0 0.0
      %1562 = vmatpush1.msra.mxu0 0.0
      %1563 = vmatprep.subr.mxu0 0.0
      %1564 = vmatpush1.msra.mxu0 0.0
      %1565 = vmatprep.subr.mxu0 0.0
      %1566 = vmatpush1.msra.mxu0 0.0
      %1567 = vmatprep.mubr.f32.mxu0 0.0
      %1568 = vmatmul.mubr.f32.gmra.mrb[0].mxu0 %v1439
      %v1569 = vpop.f32.mrb[0].mxu0
      %v1570 = vadd.f32 %v792, %v1569
      %v1571 = vpop.f32.mrb[0].mxu0
      %1572 = vmatprep.mubr.f32.mxu0 0.0
      %1573 = vmatmul.mubr.f32.gmra.mrb[0].mxu0 %v1441
      %v1574 = vpop.f32.mrb[0].mxu0
      %v1575 = vadd.f32 %v792, %v1574
      %v1576 = vpop.f32.mrb[0].mxu0
      %1577 = vmatprep.mubr.f32.mxu0 0.0
      %1578 = vmatmul.mubr.f32.gmra.mrb[0].mxu0 %v1443
      %v1579 = vpop.f32.mrb[0].mxu0
      %v1580 = vadd.f32 %v792, %v1579
      %v1581 = vpop.f32.mrb[0].mxu0
      %1582 = vmatprep.mubr.f32.mxu0 0.0
      %1583 = vmatmul.mubr.f32.gmra.mrb[0].mxu0 %v1445
      %v1584 = vpop.f32.mrb[0].mxu0
      %v1585 = vadd.f32 %v792, %v1584
      %v1586 = vpop.f32.mrb[0].mxu0
      %1587 = vmatprep.mubr.f32.mxu0 0.0
      %1588 = vmatmul.mubr.f32.gmra.mrb[0].mxu0 %v1447
      %v1589 = vpop.f32.mrb[0].mxu0
      %v1590 = vadd.f32 %v792, %v1589
      %v1591 = vpop.f32.mrb[0].mxu0
      %1592 = vmatprep.mubr.f32.mxu0 0.0
      %1593 = vmatmul.mubr.f32.gmra.mrb[0].mxu0 %v1449
      %v1594 = vpop.f32.mrb[0].mxu0
      %v1595 = vadd.f32 %v792, %v1594
      %v1596 = vpop.f32.mrb[0].mxu0
      %1597 = vmatprep.mubr.f32.mxu0 0.0
      %1598 = vmatmul.mubr.f32.gmra.mrb[0].mxu0 %v1451
      %v1599 = vpop.f32.mrb[0].mxu0
      %v1600 = vadd.f32 %v792, %v1599
      %v1601 = vpop.f32.mrb[0].mxu0
      %1602 = vmatprep.mubr.f32.mxu0 0.0
      %1603 = vmatmul.mubr.f32.gmra.mrb[0].mxu0 %v1453
      %v1604 = vpop.f32.mrb[0].mxu0
      %v1605 = vadd.f32 %v792, %v1604
      %v1606 = vpop.f32.mrb[0].mxu0
      %1607 = vmatprep.mubr.f32.mxu0 0.0
      %1608 = vmatmul.mubr.f32.gmra.mrb[0].mxu0 %v1455
      %v1609 = vpop.f32.mrb[0].mxu0
      %v1610 = vadd.f32 %v792, %v1609
      %v1611 = vpop.f32.mrb[0].mxu0
      %1612 = vmatprep.mubr.f32.mxu0 0.0
      %1613 = vmatmul.mubr.f32.gmra.mrb[0].mxu0 %v1457
      %v1614 = vpop.f32.mrb[0].mxu0
      %v1615 = vadd.f32 %v792, %v1614
      %v1616 = vpop.f32.mrb[0].mxu0
      %1617 = vmatprep.mubr.f32.mxu0 0.0
      %1618 = vmatmul.mubr.f32.gmra.mrb[0].mxu0 %v1459
      %v1619 = vpop.f32.mrb[0].mxu0
      %v1620 = vadd.f32 %v792, %v1619
      %v1621 = vpop.f32.mrb[0].mxu0
      %1622 = vmatprep.mubr.f32.mxu0 0.0
      %1623 = vmatmul.mubr.f32.gmra.mrb[0].mxu0 %v1461
      %v1624 = vpop.f32.mrb[0].mxu0
      %v1625 = vadd.f32 %v792, %v1624
      %v1626 = vpop.f32.mrb[0].mxu0
      %1627 = vmatprep.mubr.f32.mxu0 0.0
      %1628 = vmatmul.mubr.f32.gmra.mrb[0].mxu0 %v1463
      %v1629 = vpop.f32.mrb[0].mxu0
      %v1630 = vadd.f32 %v792, %v1629
      %v1631 = vpop.f32.mrb[0].mxu0
      %1632 = vmatprep.mubr.f32.mxu0 0.0
      %1633 = vmatmul.mubr.f32.gmra.mrb[0].mxu0 %v1465
      %v1634 = vpop.f32.mrb[0].mxu0
      %v1635 = vadd.f32 %v792, %v1634
      %v1636 = vpop.f32.mrb[0].mxu0
      %1637 = vmatprep.mubr.f32.mxu0 0.0
      %1638 = vmatmul.mubr.f32.gmra.mrb[0].mxu0 %v1467
      %v1639 = vpop.f32.mrb[0].mxu0
      %v1640 = vadd.f32 %v792, %v1639
      %v1641 = vpop.f32.mrb[0].mxu0
      %1642 = vmatprep.mubr.f32.mxu0 0.0
      %1643 = vmatmul.mubr.f32.gmra.mrb[0].mxu0 %v1469
      %v1644 = vpop.f32.mrb[0].mxu0
      %v1645 = vadd.f32 %v792, %v1644
      %v1646 = vpop.f32.mrb[0].mxu0
      %1647 = vmatprep.mubr.f32.mxu0 0.0
      %1648 = vmatmul.mubr.f32.gmra.mrb[0].mxu0 %v1471
      %v1649 = vpop.f32.mrb[0].mxu0
      %v1650 = vadd.f32 %v792, %v1649
      %v1651 = vpop.f32.mrb[0].mxu0
      %1652 = vmatprep.mubr.f32.mxu0 0.0
      %1653 = vmatmul.mubr.f32.gmra.mrb[0].mxu0 %v1473
      %v1654 = vpop.f32.mrb[0].mxu0
      %v1655 = vadd.f32 %v792, %v1654
      %v1656 = vpop.f32.mrb[0].mxu0
      %1657 = vmatprep.mubr.f32.mxu0 0.0
      %1658 = vmatmul.mubr.f32.gmra.mrb[0].mxu0 %v1475
      %v1659 = vpop.f32.mrb[0].mxu0
      %v1660 = vadd.f32 %v792, %v1659
      %v1661 = vpop.f32.mrb[0].mxu0
      %1662 = vmatprep.mubr.f32.mxu0 0.0
      %1663 = vmatmul.mubr.f32.gmra.mrb[0].mxu0 %v1477
      %v1664 = vpop.f32.mrb[0].mxu0
      %v1665 = vadd.f32 %v792, %v1664
      %v1666 = vpop.f32.mrb[0].mxu0
      %1667 = vmatprep.mubr.f32.mxu0 0.0
      %1668 = vmatmul.mubr.f32.gmra.mrb[0].mxu0 %v1479
      %v1669 = vpop.f32.mrb[0].mxu0
      %v1670 = vadd.f32 %v792, %v1669
      %v1671 = vpop.f32.mrb[0].mxu0
      %1672 = vmatprep.mubr.f32.mxu0 0.0
      %1673 = vmatmul.mubr.f32.gmra.mrb[0].mxu0 %v1481
      %v1674 = vpop.f32.mrb[0].mxu0
      %v1675 = vadd.f32 %v792, %v1674
      %v1676 = vpop.f32.mrb[0].mxu0
      %1677 = vmatprep.mubr.f32.mxu0 0.0
      %1678 = vmatmul.mubr.f32.gmra.mrb[0].mxu0 %v1483
      %v1679 = vpop.f32.mrb[0].mxu0
      %v1680 = vadd.f32 %v792, %v1679
      %v1681 = vpop.f32.mrb[0].mxu0
      %1682 = vmatprep.mubr.f32.mxu0 0.0
      %1683 = vmatmul.mubr.f32.gmra.mrb[0].mxu0 %v1485
      %v1684 = vpop.f32.mrb[0].mxu0
      %v1685 = vadd.f32 %v792, %v1684
      %v1686 = vpop.f32.mrb[0].mxu0
      %1687 = vmatprep.mubr.f32.mxu0 0.0
      %1688 = vmatmul.mubr.f32.gmra.mrb[0].mxu0 %v1487
      %v1689 = vpop.f32.mrb[0].mxu0
      %v1690 = vadd.f32 %v792, %v1689
      %v1691 = vpop.f32.mrb[0].mxu0
      %1692 = vmatprep.mubr.f32.mxu0 0.0
      %1693 = vmatmul.mubr.f32.gmra.mrb[0].mxu0 %v1489
      %v1694 = vpop.f32.mrb[0].mxu0
      %v1695 = vadd.f32 %v792, %v1694
      %v1696 = vpop.f32.mrb[0].mxu0
      %1697 = vmatprep.mubr.f32.mxu0 0.0
      %1698 = vmatmul.mubr.f32.gmra.mrb[0].mxu0 %v1491
      %v1699 = vpop.f32.mrb[0].mxu0
      %v1700 = vadd.f32 %v792, %v1699
      %v1701 = vpop.f32.mrb[0].mxu0
      %1702 = vmatprep.mubr.f32.mxu0 0.0
      %1703 = vmatmul.mubr.f32.gmra.mrb[0].mxu0 %v1493
      %v1704 = vpop.f32.mrb[0].mxu0
      %v1705 = vadd.f32 %v792, %v1704
      %v1706 = vpop.f32.mrb[0].mxu0
      %1707 = vmatprep.mubr.f32.mxu0 0.0
      %1708 = vmatmul.mubr.f32.gmra.mrb[0].mxu0 %v1495
      %v1709 = vpop.f32.mrb[0].mxu0
      %v1710 = vadd.f32 %v792, %v1709
      %v1711 = vpop.f32.mrb[0].mxu0
      %1712 = vmatprep.mubr.f32.mxu0 0.0
      %1713 = vmatmul.mubr.f32.gmra.mrb[0].mxu0 %v1497
      %v1714 = vpop.f32.mrb[0].mxu0
      %v1715 = vadd.f32 %v792, %v1714
      %v1716 = vpop.f32.mrb[0].mxu0
      %1717 = vmatprep.mubr.f32.mxu0 0.0
      %1718 = vmatmul.mubr.f32.gmra.mrb[0].mxu0 %v1499
      %v1719 = vpop.f32.mrb[0].mxu0
      %v1720 = vadd.f32 %v792, %v1719
      %v1721 = vpop.f32.mrb[0].mxu0
      %1722 = vmatprep.mubr.f32.mxu0 0.0
      %1723 = vmatmul.mubr.f32.gmra.mrb[0].mxu0 %v1501
      %v1724 = vpop.f32.mrb[0].mxu0
      %v1725 = vadd.f32 %v792, %v1724
      %v1726 = vpop.f32.mrb[0].mxu0
      %1727 = vdwg.mxu0
      %s1728 = scalar_lea.vmem %s206, 256
      %1729 = vst.msk [vmem:[%s1728] sm:$0xff] %vm687, %v1570
      %1730 = vst.msk [vmem:[%s1728 + $0x8] sm:$0xff] %vm687, %v1575
      %1731 = vst.msk [vmem:[%s1728 + $0x10] sm:$0xff] %vm687, %v1580
      %1732 = vst.msk [vmem:[%s1728 + $0x18] sm:$0xff] %vm687, %v1585
      %1733 = vst.msk [vmem:[%s1728 + $0x20] sm:$0xff] %vm687, %v1590
      %1734 = vst.msk [vmem:[%s1728 + $0x28] sm:$0xff] %vm687, %v1595
      %1735 = vst.msk [vmem:[%s1728 + $0x30] sm:$0xff] %vm687, %v1600
      %1736 = vst.msk [vmem:[%s1728 + $0x38] sm:$0xff] %vm687, %v1605
      %1737 = vst.msk [vmem:[%s1728 + $0x40] sm:$0xff] %vm687, %v1610
      %1738 = vst.msk [vmem:[%s1728 + $0x48] sm:$0xff] %vm687, %v1615
      %1739 = vst.msk [vmem:[%s1728 + $0x50] sm:$0xff] %vm687, %v1620
      %1740 = vst.msk [vmem:[%s1728 + $0x58] sm:$0xff] %vm687, %v1625
      %1741 = vst.msk [vmem:[%s1728 + $0x60] sm:$0xff] %vm687, %v1630
      %1742 = vst.msk [vmem:[%s1728 + $0x68] sm:$0xff] %vm687, %v1635
      %1743 = vst.msk [vmem:[%s1728 + $0x70] sm:$0xff] %vm687, %v1640
      %1744 = vst.msk [vmem:[%s1728 + $0x78] sm:$0xff] %vm687, %v1645
      %1745 = vst.msk [vmem:[%s1728 + $0x80] sm:$0xff] %vm687, %v1650
      %1746 = vst.msk [vmem:[%s1728 + $0x88] sm:$0xff] %vm687, %v1655
      %1747 = vst.msk [vmem:[%s1728 + $0x90] sm:$0xff] %vm687, %v1660
      %1748 = vst.msk [vmem:[%s1728 + $0x98] sm:$0xff] %vm687, %v1665
      %1749 = vst.msk [vmem:[%s1728 + $0xa0] sm:$0xff] %vm687, %v1670
      %1750 = vst.msk [vmem:[%s1728 + $0xa8] sm:$0xff] %vm687, %v1675
      %1751 = vst.msk [vmem:[%s1728 + $0xb0] sm:$0xff] %vm687, %v1680
      %1752 = vst.msk [vmem:[%s1728 + $0xb8] sm:$0xff] %vm687, %v1685
      %1753 = vst.msk [vmem:[%s1728 + $0xc0] sm:$0xff] %vm687, %v1690
      %1754 = vst.msk [vmem:[%s1728 + $0xc8] sm:$0xff] %vm687, %v1695
      %1755 = vst.msk [vmem:[%s1728 + $0xd0] sm:$0xff] %vm687, %v1700
      %1756 = vst.msk [vmem:[%s1728 + $0xd8] sm:$0xff] %vm687, %v1705
      %1757 = vst.msk [vmem:[%s1728 + $0xe0] sm:$0xff] %vm687, %v1710
      %1758 = vst.msk [vmem:[%s1728 + $0xe8] sm:$0xff] %vm687, %v1715
      %1759 = vst.msk [vmem:[%s1728 + $0xf0] sm:$0xff] %vm687, %v1720
      %1760 = vst.msk [vmem:[%s1728 + $0xf8] sm:$0xff] %vm687, %v1725
      %1761 = vrot.lane.b32.xlu0 %v588, 4
      %v1762 = vpop.permute.xlu0 %1761
      %1763 = vrot.lane.b32.xlu0 %v590, 4
      %v1764 = vpop.permute.xlu0 %1763
      %1769 = vrot.lane.b32.xlu0 %v258, 8
      %v1770 = vpop.permute.xlu0 %1769
      %1771 = vrot.lane.b32.xlu0 %v259, 8
      %v1772 = vpop.permute.xlu0 %1771
      %v1776 = vrot.slane %v258, 1
      %v1777 = vrot.slane %v259, 1
      %v1778 = vsel %vm310, %v1776, %v1777
      %v1779 = vrot.slane %v260, 1
      %v1780 = vsel %vm310, %v1777, %v1779
      %1781 = vrot.lane.b32.xlu0 %v1778, 12
      %v1782 = vpop.permute.xlu0 %1781
      %1783 = vrot.lane.b32.xlu0 %v1780, 12
      %v1784 = vpop.permute.xlu0 %1783
      %v1787 = vsel %vm687, %v255, %v1762
      %v1788 = vsel %vm687, %v256, %v1764
      %v1789 = vsel %vm720, %v1787, %v1770
      %v1790 = vsel %vm720, %v1788, %v1772
      %v1791 = vsel %vm753, %v1789, %v1782
      %v1792 = vsel %vm753, %v1790, %v1784
      %s1793 = scalar_lea.vmem %s1, 32
      %v1794 = vld [vmem:[%s1793] sm:$0xff]
      %v1795 = vld [vmem:[%s1793 + $0x8] sm:$0xff]
      %v1797 = vsel %vm794, %v1791, 0
      %v1800 = vsel %vm794, %v1792, 0
      %1802 = vmatprep.subr.mxu0 0.0
      %1803 = vmatpush1.msra.mxu0 %v1794
      %1804 = vmatprep.subr.mxu0 0.0
      %1805 = vmatpush1.msra.mxu0 %v1795
      %1806 = vmatprep.subr.mxu0 0.0
      %1807 = vmatpush1.msra.mxu0 0.0
      %1808 = vmatprep.subr.mxu0 0.0
      %1809 = vmatpush1.msra.mxu0 0.0
      %1810 = vmatprep.subr.mxu0 0.0
      %1811 = vmatpush1.msra.mxu0 0.0
      %1812 = vmatprep.subr.mxu0 0.0
      %1813 = vmatpush1.msra.mxu0 0.0
      %1814 = vmatprep.subr.mxu0 0.0
      %1815 = vmatpush1.msra.mxu0 0.0
      %1816 = vmatprep.subr.mxu0 0.0
      %1817 = vmatpush1.msra.mxu0 0.0
      %1818 = vmatprep.subr.mxu0 0.0
      %1819 = vmatpush1.msra.mxu0 0.0
      %1820 = vmatprep.subr.mxu0 0.0
      %1821 = vmatpush1.msra.mxu0 0.0
      %1822 = vmatprep.subr.mxu0 0.0
      %1823 = vmatpush1.msra.mxu0 0.0
      %1824 = vmatprep.subr.mxu0 0.0
      %1825 = vmatpush1.msra.mxu0 0.0
      %1826 = vmatprep.subr.mxu0 0.0
      %1827 = vmatpush1.msra.mxu0 0.0
      %1828 = vmatprep.subr.mxu0 0.0
      %1829 = vmatpush1.msra.mxu0 0.0
      %1830 = vmatprep.subr.mxu0 0.0
      %1831 = vmatpush1.msra.mxu0 0.0
      %1832 = vmatprep.subr.mxu0 0.0
      %1833 = vmatpush1.msra.mxu0 0.0
      %1834 = vmatprep.subr.mxu0 0.0
      %1835 = vmatpush1.msra.mxu0 0.0
      %1836 = vmatprep.subr.mxu0 0.0
      %1837 = vmatpush1.msra.mxu0 0.0
      %1838 = vmatprep.subr.mxu0 0.0
      %1839 = vmatpush1.msra.mxu0 0.0
      %1840 = vmatprep.subr.mxu0 0.0
      %1841 = vmatpush1.msra.mxu0 0.0
      %1842 = vmatprep.subr.mxu0 0.0
      %1843 = vmatpush1.msra.mxu0 0.0
      %1844 = vmatprep.subr.mxu0 0.0
      %1845 = vmatpush1.msra.mxu0 0.0
      %1846 = vmatprep.subr.mxu0 0.0
      %1847 = vmatpush1.msra.mxu0 0.0
      %1848 = vmatprep.subr.mxu0 0.0
      %1849 = vmatpush1.msra.mxu0 0.0
      %1850 = vmatprep.subr.mxu0 0.0
      %1851 = vmatpush1.msra.mxu0 0.0
      %1852 = vmatprep.subr.mxu0 0.0
      %1853 = vmatpush1.msra.mxu0 0.0
      %1854 = vmatprep.subr.mxu0 0.0
      %1855 = vmatpush1.msra.mxu0 0.0
      %1856 = vmatprep.subr.mxu0 0.0
      %1857 = vmatpush1.msra.mxu0 0.0
      %1858 = vmatprep.subr.mxu0 0.0
      %1859 = vmatpush1.msra.mxu0 0.0
      %1860 = vmatprep.subr.mxu0 0.0
      %1861 = vmatpush1.msra.mxu0 0.0
      %1862 = vmatprep.subr.mxu0 0.0
      %1863 = vmatpush1.msra.mxu0 0.0
      %1864 = vmatprep.subr.mxu0 0.0
      %1865 = vmatpush1.msra.mxu0 0.0
      %1866 = vmatprep.mubr.f32.mxu0 0.0
      %1867 = vmatmul.mubr.f32.gmra.mrb[0].mxu0 %v802
      %v1868 = vpop.f32.mrb[0].mxu0
      %v1869 = vadd.f32 %v792, %v1868
      %v1870 = vpop.f32.mrb[0].mxu0
      %1871 = vmatprep.mubr.f32.mxu0 0.0
      %1872 = vmatmul.mubr.f32.gmra.mrb[0].mxu0 %v805
      %v1873 = vpop.f32.mrb[0].mxu0
      %v1874 = vadd.f32 %v792, %v1873
      %v1875 = vpop.f32.mrb[0].mxu0
      %1876 = vmatprep.mubr.f32.mxu0 0.0
      %1877 = vmatmul.mubr.f32.gmra.mrb[0].mxu0 %v808
      %v1878 = vpop.f32.mrb[0].mxu0
      %v1879 = vadd.f32 %v792, %v1878
      %v1880 = vpop.f32.mrb[0].mxu0
      %1881 = vmatprep.mubr.f32.mxu0 0.0
      %1882 = vmatmul.mubr.f32.gmra.mrb[0].mxu0 %v811
      %v1883 = vpop.f32.mrb[0].mxu0
      %v1884 = vadd.f32 %v792, %v1883
      %v1885 = vpop.f32.mrb[0].mxu0
      %1886 = vmatprep.mubr.f32.mxu0 0.0
      %1887 = vmatmul.mubr.f32.gmra.mrb[0].mxu0 %v814
      %v1888 = vpop.f32.mrb[0].mxu0
      %v1889 = vadd.f32 %v792, %v1888
      %v1890 = vpop.f32.mrb[0].mxu0
      %1891 = vmatprep.mubr.f32.mxu0 0.0
      %1892 = vmatmul.mubr.f32.gmra.mrb[0].mxu0 %v817
      %v1893 = vpop.f32.mrb[0].mxu0
      %v1894 = vadd.f32 %v792, %v1893
      %v1895 = vpop.f32.mrb[0].mxu0
      %1896 = vmatprep.mubr.f32.mxu0 0.0
      %1897 = vmatmul.mubr.f32.gmra.mrb[0].mxu0 %v820
      %v1898 = vpop.f32.mrb[0].mxu0
      %v1899 = vadd.f32 %v792, %v1898
      %v1900 = vpop.f32.mrb[0].mxu0
      %1901 = vmatprep.mubr.f32.mxu0 0.0
      %1902 = vmatmul.mubr.f32.gmra.mrb[0].mxu0 %v823
      %v1903 = vpop.f32.mrb[0].mxu0
      %v1904 = vadd.f32 %v792, %v1903
      %v1905 = vpop.f32.mrb[0].mxu0
      %1906 = vmatprep.mubr.f32.mxu0 0.0
      %1907 = vmatmul.mubr.f32.gmra.mrb[0].mxu0 %v826
      %v1908 = vpop.f32.mrb[0].mxu0
      %v1909 = vadd.f32 %v792, %v1908
      %v1910 = vpop.f32.mrb[0].mxu0
      %1911 = vmatprep.mubr.f32.mxu0 0.0
      %1912 = vmatmul.mubr.f32.gmra.mrb[0].mxu0 %v829
      %v1913 = vpop.f32.mrb[0].mxu0
      %v1914 = vadd.f32 %v792, %v1913
      %v1915 = vpop.f32.mrb[0].mxu0
      %1916 = vmatprep.mubr.f32.mxu0 0.0
      %1917 = vmatmul.mubr.f32.gmra.mrb[0].mxu0 %v832
      %v1918 = vpop.f32.mrb[0].mxu0
      %v1919 = vadd.f32 %v792, %v1918
      %v1920 = vpop.f32.mrb[0].mxu0
      %1921 = vmatprep.mubr.f32.mxu0 0.0
      %1922 = vmatmul.mubr.f32.gmra.mrb[0].mxu0 %v835
      %v1923 = vpop.f32.mrb[0].mxu0
      %v1924 = vadd.f32 %v792, %v1923
      %v1925 = vpop.f32.mrb[0].mxu0
      %1926 = vmatprep.mubr.f32.mxu0 0.0
      %1927 = vmatmul.mubr.f32.gmra.mrb[0].mxu0 %v838
      %v1928 = vpop.f32.mrb[0].mxu0
      %v1929 = vadd.f32 %v792, %v1928
      %v1930 = vpop.f32.mrb[0].mxu0
      %1931 = vmatprep.mubr.f32.mxu0 0.0
      %1932 = vmatmul.mubr.f32.gmra.mrb[0].mxu0 %v841
      %v1933 = vpop.f32.mrb[0].mxu0
      %v1934 = vadd.f32 %v792, %v1933
      %v1935 = vpop.f32.mrb[0].mxu0
      %1936 = vmatprep.mubr.f32.mxu0 0.0
      %1937 = vmatmul.mubr.f32.gmra.mrb[0].mxu0 %v844
      %v1938 = vpop.f32.mrb[0].mxu0
      %v1939 = vadd.f32 %v792, %v1938
      %v1940 = vpop.f32.mrb[0].mxu0
      %1941 = vmatprep.mubr.f32.mxu0 0.0
      %1942 = vmatmul.mubr.f32.gmra.mrb[0].mxu0 %v847
      %v1943 = vpop.f32.mrb[0].mxu0
      %v1944 = vadd.f32 %v792, %v1943
      %v1945 = vpop.f32.mrb[0].mxu0
      %1946 = vmatprep.mubr.f32.mxu0 0.0
      %1947 = vmatmul.mubr.f32.gmra.mrb[0].mxu0 %v850
      %v1948 = vpop.f32.mrb[0].mxu0
      %v1949 = vadd.f32 %v792, %v1948
      %v1950 = vpop.f32.mrb[0].mxu0
      %1951 = vmatprep.mubr.f32.mxu0 0.0
      %1952 = vmatmul.mubr.f32.gmra.mrb[0].mxu0 %v853
      %v1953 = vpop.f32.mrb[0].mxu0
      %v1954 = vadd.f32 %v792, %v1953
      %v1955 = vpop.f32.mrb[0].mxu0
      %1956 = vmatprep.mubr.f32.mxu0 0.0
      %1957 = vmatmul.mubr.f32.gmra.mrb[0].mxu0 %v856
      %v1958 = vpop.f32.mrb[0].mxu0
      %v1959 = vadd.f32 %v792, %v1958
      %v1960 = vpop.f32.mrb[0].mxu0
      %1961 = vmatprep.mubr.f32.mxu0 0.0
      %1962 = vmatmul.mubr.f32.gmra.mrb[0].mxu0 %v859
      %v1963 = vpop.f32.mrb[0].mxu0
      %v1964 = vadd.f32 %v792, %v1963
      %v1965 = vpop.f32.mrb[0].mxu0
      %1966 = vmatprep.mubr.f32.mxu0 0.0
      %1967 = vmatmul.mubr.f32.gmra.mrb[0].mxu0 %v862
      %v1968 = vpop.f32.mrb[0].mxu0
      %v1969 = vadd.f32 %v792, %v1968
      %v1970 = vpop.f32.mrb[0].mxu0
      %1971 = vmatprep.mubr.f32.mxu0 0.0
      %1972 = vmatmul.mubr.f32.gmra.mrb[0].mxu0 %v865
      %v1973 = vpop.f32.mrb[0].mxu0
      %v1974 = vadd.f32 %v792, %v1973
      %v1975 = vpop.f32.mrb[0].mxu0
      %1976 = vmatprep.mubr.f32.mxu0 0.0
      %1977 = vmatmul.mubr.f32.gmra.mrb[0].mxu0 %v868
      %v1978 = vpop.f32.mrb[0].mxu0
      %v1979 = vadd.f32 %v792, %v1978
      %v1980 = vpop.f32.mrb[0].mxu0
      %1981 = vmatprep.mubr.f32.mxu0 0.0
      %1982 = vmatmul.mubr.f32.gmra.mrb[0].mxu0 %v871
      %v1983 = vpop.f32.mrb[0].mxu0
      %v1984 = vadd.f32 %v792, %v1983
      %v1985 = vpop.f32.mrb[0].mxu0
      %1986 = vmatprep.mubr.f32.mxu0 0.0
      %1987 = vmatmul.mubr.f32.gmra.mrb[0].mxu0 %v874
      %v1988 = vpop.f32.mrb[0].mxu0
      %v1989 = vadd.f32 %v792, %v1988
      %v1990 = vpop.f32.mrb[0].mxu0
      %1991 = vmatprep.mubr.f32.mxu0 0.0
      %1992 = vmatmul.mubr.f32.gmra.mrb[0].mxu0 %v877
      %v1993 = vpop.f32.mrb[0].mxu0
      %v1994 = vadd.f32 %v792, %v1993
      %v1995 = vpop.f32.mrb[0].mxu0
      %1996 = vmatprep.mubr.f32.mxu0 0.0
      %1997 = vmatmul.mubr.f32.gmra.mrb[0].mxu0 %v880
      %v1998 = vpop.f32.mrb[0].mxu0
      %v1999 = vadd.f32 %v792, %v1998
      %v2000 = vpop.f32.mrb[0].mxu0
      %2001 = vmatprep.mubr.f32.mxu0 0.0
      %2002 = vmatmul.mubr.f32.gmra.mrb[0].mxu0 %v883
      %v2003 = vpop.f32.mrb[0].mxu0
      %v2004 = vadd.f32 %v792, %v2003
      %v2005 = vpop.f32.mrb[0].mxu0
      %2006 = vmatprep.mubr.f32.mxu0 0.0
      %2007 = vmatmul.mubr.f32.gmra.mrb[0].mxu0 %v886
      %v2008 = vpop.f32.mrb[0].mxu0
      %v2009 = vadd.f32 %v792, %v2008
      %v2010 = vpop.f32.mrb[0].mxu0
      %2011 = vmatprep.mubr.f32.mxu0 0.0
      %2012 = vmatmul.mubr.f32.gmra.mrb[0].mxu0 %v889
      %v2013 = vpop.f32.mrb[0].mxu0
      %v2014 = vadd.f32 %v792, %v2013
      %v2015 = vpop.f32.mrb[0].mxu0
      %2016 = vmatprep.mubr.f32.mxu0 0.0
      %2017 = vmatmul.mubr.f32.gmra.mrb[0].mxu0 %v1797
      %v2018 = vpop.f32.mrb[0].mxu0
      %v2019 = vadd.f32 %v792, %v2018
      %v2020 = vpop.f32.mrb[0].mxu0
      %2021 = vmatprep.mubr.f32.mxu0 0.0
      %2022 = vmatmul.mubr.f32.gmra.mrb[0].mxu0 %v1800
      %v2023 = vpop.f32.mrb[0].mxu0
      %v2024 = vadd.f32 %v792, %v2023
      %v2025 = vpop.f32.mrb[0].mxu0
      %2026 = vdwg.mxu0
      %s2027 = scalar_lea.vmem %s206, 512
      %2028 = vst.msk [vmem:[%s2027] sm:$0xff] %vm687, %v1869
      %2029 = vst.msk [vmem:[%s2027 + $0x8] sm:$0xff] %vm687, %v1874
      %2030 = vst.msk [vmem:[%s2027 + $0x10] sm:$0xff] %vm687, %v1879
      %2031 = vst.msk [vmem:[%s2027 + $0x18] sm:$0xff] %vm687, %v1884
      %2032 = vst.msk [vmem:[%s2027 + $0x20] sm:$0xff] %vm687, %v1889
      %2033 = vst.msk [vmem:[%s2027 + $0x28] sm:$0xff] %vm687, %v1894
      %2034 = vst.msk [vmem:[%s2027 + $0x30] sm:$0xff] %vm687, %v1899
      %2035 = vst.msk [vmem:[%s2027 + $0x38] sm:$0xff] %vm687, %v1904
      %2036 = vst.msk [vmem:[%s2027 + $0x40] sm:$0xff] %vm687, %v1909
      %2037 = vst.msk [vmem:[%s2027 + $0x48] sm:$0xff] %vm687, %v1914
      %2038 = vst.msk [vmem:[%s2027 + $0x50] sm:$0xff] %vm687, %v1919
      %2039 = vst.msk [vmem:[%s2027 + $0x58] sm:$0xff] %vm687, %v1924
      %2040 = vst.msk [vmem:[%s2027 + $0x60] sm:$0xff] %vm687, %v1929
      %2041 = vst.msk [vmem:[%s2027 + $0x68] sm:$0xff] %vm687, %v1934
      %2042 = vst.msk [vmem:[%s2027 + $0x70] sm:$0xff] %vm687, %v1939
      %2043 = vst.msk [vmem:[%s2027 + $0x78] sm:$0xff] %vm687, %v1944
      %2044 = vst.msk [vmem:[%s2027 + $0x80] sm:$0xff] %vm687, %v1949
      %2045 = vst.msk [vmem:[%s2027 + $0x88] sm:$0xff] %vm687, %v1954
      %2046 = vst.msk [vmem:[%s2027 + $0x90] sm:$0xff] %vm687, %v1959
      %2047 = vst.msk [vmem:[%s2027 + $0x98] sm:$0xff] %vm687, %v1964
      %2048 = vst.msk [vmem:[%s2027 + $0xa0] sm:$0xff] %vm687, %v1969
      %2049 = vst.msk [vmem:[%s2027 + $0xa8] sm:$0xff] %vm687, %v1974
      %2050 = vst.msk [vmem:[%s2027 + $0xb0] sm:$0xff] %vm687, %v1979
      %2051 = vst.msk [vmem:[%s2027 + $0xb8] sm:$0xff] %vm687, %v1984
      %2052 = vst.msk [vmem:[%s2027 + $0xc0] sm:$0xff] %vm687, %v1989
      %2053 = vst.msk [vmem:[%s2027 + $0xc8] sm:$0xff] %vm687, %v1994
      %2054 = vst.msk [vmem:[%s2027 + $0xd0] sm:$0xff] %vm687, %v1999
      %2055 = vst.msk [vmem:[%s2027 + $0xd8] sm:$0xff] %vm687, %v2004
      %2056 = vst.msk [vmem:[%s2027 + $0xe0] sm:$0xff] %vm687, %v2009
      %2057 = vst.msk [vmem:[%s2027 + $0xe8] sm:$0xff] %vm687, %v2014
      %2058 = vst.msk [vmem:[%s2027 + $0xf0] sm:$0xff] %vm687, %v2019
      %2059 = vst.msk [vmem:[%s2027 + $0xf8] sm:$0xff] %vm687, %v2024
      %2060 = vrot.lane.b32.xlu0 %v589, 4
      %v2061 = vpop.permute.xlu0 %2060
      %2063 = vrot.lane.b32.xlu0 %v260, 8
      %v2064 = vpop.permute.xlu0 %2063
      %2066 = vrot.lane.b32.xlu0 %v1779, 12
      %v2067 = vpop.permute.xlu0 %2066
      %v2069 = vsel %vm687, %v257, %v2061
      %v2070 = vsel %vm720, %v2069, %v2064
      %v2071 = vsel %vm753, %v2070, %v2067
      %v2073 = vrot.slane %v1791, 1
      %v2074 = vrot.slane %v1792, 1
      %v2075 = vsel %vm310, %v2073, %v2074
      %v2076 = vrot.slane %v2071, 1
      %v2077 = vsel %vm310, %v2074, %v2076
      %s2078 = scalar_lea.vmem %s1, 48
      %v2079 = vld [vmem:[%s2078] sm:$0xff]
      %v2080 = vld [vmem:[%s2078 + $0x8] sm:$0xff]
      %v2081 = vsel %vm794, %v2075, 0
      %v2083 = vsel %vm794, %v2077, 0
      %2085 = vmatprep.subr.mxu0 0.0
      %2086 = vmatpush1.msra.mxu0 %v2079
      %2087 = vmatprep.subr.mxu0 0.0
      %2088 = vmatpush1.msra.mxu0 %v2080
      %2089 = vmatprep.subr.mxu0 0.0
      %2090 = vmatpush1.msra.mxu0 0.0
      %2091 = vmatprep.subr.mxu0 0.0
      %2092 = vmatpush1.msra.mxu0 0.0
      %2093 = vmatprep.subr.mxu0 0.0
      %2094 = vmatpush1.msra.mxu0 0.0
      %2095 = vmatprep.subr.mxu0 0.0
      %2096 = vmatpush1.msra.mxu0 0.0
      %2097 = vmatprep.subr.mxu0 0.0
      %2098 = vmatpush1.msra.mxu0 0.0
      %2099 = vmatprep.subr.mxu0 0.0
      %2100 = vmatpush1.msra.mxu0 0.0
      %2101 = vmatprep.subr.mxu0 0.0
      %2102 = vmatpush1.msra.mxu0 0.0
      %2103 = vmatprep.subr.mxu0 0.0
      %2104 = vmatpush1.msra.mxu0 0.0
      %2105 = vmatprep.subr.mxu0 0.0
      %2106 = vmatpush1.msra.mxu0 0.0
      %2107 = vmatprep.subr.mxu0 0.0
      %2108 = vmatpush1.msra.mxu0 0.0
      %2109 = vmatprep.subr.mxu0 0.0
      %2110 = vmatpush1.msra.mxu0 0.0
      %2111 = vmatprep.subr.mxu0 0.0
      %2112 = vmatpush1.msra.mxu0 0.0
      %2113 = vmatprep.subr.mxu0 0.0
      %2114 = vmatpush1.msra.mxu0 0.0
      %2115 = vmatprep.subr.mxu0 0.0
      %2116 = vmatpush1.msra.mxu0 0.0
      %2117 = vmatprep.subr.mxu0 0.0
      %2118 = vmatpush1.msra.mxu0 0.0
      %2119 = vmatprep.subr.mxu0 0.0
      %2120 = vmatpush1.msra.mxu0 0.0
      %2121 = vmatprep.subr.mxu0 0.0
      %2122 = vmatpush1.msra.mxu0 0.0
      %2123 = vmatprep.subr.mxu0 0.0
      %2124 = vmatpush1.msra.mxu0 0.0
      %2125 = vmatprep.subr.mxu0 0.0
      %2126 = vmatpush1.msra.mxu0 0.0
      %2127 = vmatprep.subr.mxu0 0.0
      %2128 = vmatpush1.msra.mxu0 0.0
      %2129 = vmatprep.subr.mxu0 0.0
      %2130 = vmatpush1.msra.mxu0 0.0
      %2131 = vmatprep.subr.mxu0 0.0
      %2132 = vmatpush1.msra.mxu0 0.0
      %2133 = vmatprep.subr.mxu0 0.0
      %2134 = vmatpush1.msra.mxu0 0.0
      %2135 = vmatprep.subr.mxu0 0.0
      %2136 = vmatpush1.msra.mxu0 0.0
      %2137 = vmatprep.subr.mxu0 0.0
      %2138 = vmatpush1.msra.mxu0 0.0
      %2139 = vmatprep.subr.mxu0 0.0
      %2140 = vmatpush1.msra.mxu0 0.0
      %2141 = vmatprep.subr.mxu0 0.0
      %2142 = vmatpush1.msra.mxu0 0.0
      %2143 = vmatprep.subr.mxu0 0.0
      %2144 = vmatpush1.msra.mxu0 0.0
      %2145 = vmatprep.subr.mxu0 0.0
      %2146 = vmatpush1.msra.mxu0 0.0
      %2147 = vmatprep.subr.mxu0 0.0
      %2148 = vmatpush1.msra.mxu0 0.0
      %2149 = vmatprep.mubr.f32.mxu0 0.0
      %2150 = vmatmul.mubr.f32.gmra.mrb[0].mxu0 %v1443
      %v2151 = vpop.f32.mrb[0].mxu0
      %v2152 = vadd.f32 %v792, %v2151
      %v2153 = vpop.f32.mrb[0].mxu0
      %2154 = vmatprep.mubr.f32.mxu0 0.0
      %2155 = vmatmul.mubr.f32.gmra.mrb[0].mxu0 %v1445
      %v2156 = vpop.f32.mrb[0].mxu0
      %v2157 = vadd.f32 %v792, %v2156
      %v2158 = vpop.f32.mrb[0].mxu0
      %2159 = vmatprep.mubr.f32.mxu0 0.0
      %2160 = vmatmul.mubr.f32.gmra.mrb[0].mxu0 %v1447
      %v2161 = vpop.f32.mrb[0].mxu0
      %v2162 = vadd.f32 %v792, %v2161
      %v2163 = vpop.f32.mrb[0].mxu0
      %2164 = vmatprep.mubr.f32.mxu0 0.0
      %2165 = vmatmul.mubr.f32.gmra.mrb[0].mxu0 %v1449
      %v2166 = vpop.f32.mrb[0].mxu0
      %v2167 = vadd.f32 %v792, %v2166
      %v2168 = vpop.f32.mrb[0].mxu0
      %2169 = vmatprep.mubr.f32.mxu0 0.0
      %2170 = vmatmul.mubr.f32.gmra.mrb[0].mxu0 %v1451
      %v2171 = vpop.f32.mrb[0].mxu0
      %v2172 = vadd.f32 %v792, %v2171
      %v2173 = vpop.f32.mrb[0].mxu0
      %2174 = vmatprep.mubr.f32.mxu0 0.0
      %2175 = vmatmul.mubr.f32.gmra.mrb[0].mxu0 %v1453
      %v2176 = vpop.f32.mrb[0].mxu0
      %v2177 = vadd.f32 %v792, %v2176
      %v2178 = vpop.f32.mrb[0].mxu0
      %2179 = vmatprep.mubr.f32.mxu0 0.0
      %2180 = vmatmul.mubr.f32.gmra.mrb[0].mxu0 %v1455
      %v2181 = vpop.f32.mrb[0].mxu0
      %v2182 = vadd.f32 %v792, %v2181
      %v2183 = vpop.f32.mrb[0].mxu0
      %2184 = vmatprep.mubr.f32.mxu0 0.0
      %2185 = vmatmul.mubr.f32.gmra.mrb[0].mxu0 %v1457
      %v2186 = vpop.f32.mrb[0].mxu0
      %v2187 = vadd.f32 %v792, %v2186
      %v2188 = vpop.f32.mrb[0].mxu0
      %2189 = vmatprep.mubr.f32.mxu0 0.0
      %2190 = vmatmul.mubr.f32.gmra.mrb[0].mxu0 %v1459
      %v2191 = vpop.f32.mrb[0].mxu0
      %v2192 = vadd.f32 %v792, %v2191
      %v2193 = vpop.f32.mrb[0].mxu0
      %2194 = vmatprep.mubr.f32.mxu0 0.0
      %2195 = vmatmul.mubr.f32.gmra.mrb[0].mxu0 %v1461
      %v2196 = vpop.f32.mrb[0].mxu0
      %v2197 = vadd.f32 %v792, %v2196
      %v2198 = vpop.f32.mrb[0].mxu0
      %2199 = vmatprep.mubr.f32.mxu0 0.0
      %2200 = vmatmul.mubr.f32.gmra.mrb[0].mxu0 %v1463
      %v2201 = vpop.f32.mrb[0].mxu0
      %v2202 = vadd.f32 %v792, %v2201
      %v2203 = vpop.f32.mrb[0].mxu0
      %2204 = vmatprep.mubr.f32.mxu0 0.0
      %2205 = vmatmul.mubr.f32.gmra.mrb[0].mxu0 %v1465
      %v2206 = vpop.f32.mrb[0].mxu0
      %v2207 = vadd.f32 %v792, %v2206
      %v2208 = vpop.f32.mrb[0].mxu0
      %2209 = vmatprep.mubr.f32.mxu0 0.0
      %2210 = vmatmul.mubr.f32.gmra.mrb[0].mxu0 %v1467
      %v2211 = vpop.f32.mrb[0].mxu0
      %v2212 = vadd.f32 %v792, %v2211
      %v2213 = vpop.f32.mrb[0].mxu0
      %2214 = vmatprep.mubr.f32.mxu0 0.0
      %2215 = vmatmul.mubr.f32.gmra.mrb[0].mxu0 %v1469
      %v2216 = vpop.f32.mrb[0].mxu0
      %v2217 = vadd.f32 %v792, %v2216
      %v2218 = vpop.f32.mrb[0].mxu0
      %2219 = vmatprep.mubr.f32.mxu0 0.0
      %2220 = vmatmul.mubr.f32.gmra.mrb[0].mxu0 %v1471
      %v2221 = vpop.f32.mrb[0].mxu0
      %v2222 = vadd.f32 %v792, %v2221
      %v2223 = vpop.f32.mrb[0].mxu0
      %2224 = vmatprep.mubr.f32.mxu0 0.0
      %2225 = vmatmul.mubr.f32.gmra.mrb[0].mxu0 %v1473
      %v2226 = vpop.f32.mrb[0].mxu0
      %v2227 = vadd.f32 %v792, %v2226
      %v2228 = vpop.f32.mrb[0].mxu0
      %2229 = vmatprep.mubr.f32.mxu0 0.0
      %2230 = vmatmul.mubr.f32.gmra.mrb[0].mxu0 %v1475
      %v2231 = vpop.f32.mrb[0].mxu0
      %v2232 = vadd.f32 %v792, %v2231
      %v2233 = vpop.f32.mrb[0].mxu0
      %2234 = vmatprep.mubr.f32.mxu0 0.0
      %2235 = vmatmul.mubr.f32.gmra.mrb[0].mxu0 %v1477
      %v2236 = vpop.f32.mrb[0].mxu0
      %v2237 = vadd.f32 %v792, %v2236
      %v2238 = vpop.f32.mrb[0].mxu0
      %2239 = vmatprep.mubr.f32.mxu0 0.0
      %2240 = vmatmul.mubr.f32.gmra.mrb[0].mxu0 %v1479
      %v2241 = vpop.f32.mrb[0].mxu0
      %v2242 = vadd.f32 %v792, %v2241
      %v2243 = vpop.f32.mrb[0].mxu0
      %2244 = vmatprep.mubr.f32.mxu0 0.0
      %2245 = vmatmul.mubr.f32.gmra.mrb[0].mxu0 %v1481
      %v2246 = vpop.f32.mrb[0].mxu0
      %v2247 = vadd.f32 %v792, %v2246
      %v2248 = vpop.f32.mrb[0].mxu0
      %2249 = vmatprep.mubr.f32.mxu0 0.0
      %2250 = vmatmul.mubr.f32.gmra.mrb[0].mxu0 %v1483
      %v2251 = vpop.f32.mrb[0].mxu0
      %v2252 = vadd.f32 %v792, %v2251
      %v2253 = vpop.f32.mrb[0].mxu0
      %2254 = vmatprep.mubr.f32.mxu0 0.0
      %2255 = vmatmul.mubr.f32.gmra.mrb[0].mxu0 %v1485
      %v2256 = vpop.f32.mrb[0].mxu0
      %v2257 = vadd.f32 %v792, %v2256
      %v2258 = vpop.f32.mrb[0].mxu0
      %2259 = vmatprep.mubr.f32.mxu0 0.0
      %2260 = vmatmul.mubr.f32.gmra.mrb[0].mxu0 %v1487
      %v2261 = vpop.f32.mrb[0].mxu0
      %v2262 = vadd.f32 %v792, %v2261
      %v2263 = vpop.f32.mrb[0].mxu0
      %2264 = vmatprep.mubr.f32.mxu0 0.0
      %2265 = vmatmul.mubr.f32.gmra.mrb[0].mxu0 %v1489
      %v2266 = vpop.f32.mrb[0].mxu0
      %v2267 = vadd.f32 %v792, %v2266
      %v2268 = vpop.f32.mrb[0].mxu0
      %2269 = vmatprep.mubr.f32.mxu0 0.0
      %2270 = vmatmul.mubr.f32.gmra.mrb[0].mxu0 %v1491
      %v2271 = vpop.f32.mrb[0].mxu0
      %v2272 = vadd.f32 %v792, %v2271
      %v2273 = vpop.f32.mrb[0].mxu0
      %2274 = vmatprep.mubr.f32.mxu0 0.0
      %2275 = vmatmul.mubr.f32.gmra.mrb[0].mxu0 %v1493
      %v2276 = vpop.f32.mrb[0].mxu0
      %v2277 = vadd.f32 %v792, %v2276
      %v2278 = vpop.f32.mrb[0].mxu0
      %2279 = vmatprep.mubr.f32.mxu0 0.0
      %2280 = vmatmul.mubr.f32.gmra.mrb[0].mxu0 %v1495
      %v2281 = vpop.f32.mrb[0].mxu0
      %v2282 = vadd.f32 %v792, %v2281
      %v2283 = vpop.f32.mrb[0].mxu0
      %2284 = vmatprep.mubr.f32.mxu0 0.0
      %2285 = vmatmul.mubr.f32.gmra.mrb[0].mxu0 %v1497
      %v2286 = vpop.f32.mrb[0].mxu0
      %v2287 = vadd.f32 %v792, %v2286
      %v2288 = vpop.f32.mrb[0].mxu0
      %2289 = vmatprep.mubr.f32.mxu0 0.0
      %2290 = vmatmul.mubr.f32.gmra.mrb[0].mxu0 %v1499
      %v2291 = vpop.f32.mrb[0].mxu0
      %v2292 = vadd.f32 %v792, %v2291
      %v2293 = vpop.f32.mrb[0].mxu0
      %2294 = vmatprep.mubr.f32.mxu0 0.0
      %2295 = vmatmul.mubr.f32.gmra.mrb[0].mxu0 %v1501
      %v2296 = vpop.f32.mrb[0].mxu0
      %v2297 = vadd.f32 %v792, %v2296
      %v2298 = vpop.f32.mrb[0].mxu0
      %2299 = vmatprep.mubr.f32.mxu0 0.0
      %2300 = vmatmul.mubr.f32.gmra.mrb[0].mxu0 %v2081
      %v2301 = vpop.f32.mrb[0].mxu0
      %v2302 = vadd.f32 %v792, %v2301
      %v2303 = vpop.f32.mrb[0].mxu0
      %2304 = vmatprep.mubr.f32.mxu0 0.0
      %2305 = vmatmul.mubr.f32.gmra.mrb[0].mxu0 %v2083
      %v2306 = vpop.f32.mrb[0].mxu0
      %v2307 = vadd.f32 %v792, %v2306
      %v2308 = vpop.f32.mrb[0].mxu0
      %2309 = vdwg.mxu0
      %s2310 = scalar_lea.vmem %s206, 768
      %2311 = vst.msk [vmem:[%s2310] sm:$0xff] %vm687, %v2152
      %2312 = vst.msk [vmem:[%s2310 + $0x8] sm:$0xff] %vm687, %v2157
      %2313 = vst.msk [vmem:[%s2310 + $0x10] sm:$0xff] %vm687, %v2162
      %2314 = vst.msk [vmem:[%s2310 + $0x18] sm:$0xff] %vm687, %v2167
      %2315 = vst.msk [vmem:[%s2310 + $0x20] sm:$0xff] %vm687, %v2172
      %2316 = vst.msk [vmem:[%s2310 + $0x28] sm:$0xff] %vm687, %v2177
      %2317 = vst.msk [vmem:[%s2310 + $0x30] sm:$0xff] %vm687, %v2182
      %2318 = vst.msk [vmem:[%s2310 + $0x38] sm:$0xff] %vm687, %v2187
      %2319 = vst.msk [vmem:[%s2310 + $0x40] sm:$0xff] %vm687, %v2192
      %2320 = vst.msk [vmem:[%s2310 + $0x48] sm:$0xff] %vm687, %v2197
      %2321 = vst.msk [vmem:[%s2310 + $0x50] sm:$0xff] %vm687, %v2202
      %2322 = vst.msk [vmem:[%s2310 + $0x58] sm:$0xff] %vm687, %v2207
      %2323 = vst.msk [vmem:[%s2310 + $0x60] sm:$0xff] %vm687, %v2212
      %2324 = vst.msk [vmem:[%s2310 + $0x68] sm:$0xff] %vm687, %v2217
      %2325 = vst.msk [vmem:[%s2310 + $0x70] sm:$0xff] %vm687, %v2222
      %2326 = vst.msk [vmem:[%s2310 + $0x78] sm:$0xff] %vm687, %v2227
      %2327 = vst.msk [vmem:[%s2310 + $0x80] sm:$0xff] %vm687, %v2232
      %2328 = vst.msk [vmem:[%s2310 + $0x88] sm:$0xff] %vm687, %v2237
      %2329 = vst.msk [vmem:[%s2310 + $0x90] sm:$0xff] %vm687, %v2242
      %2330 = vst.msk [vmem:[%s2310 + $0x98] sm:$0xff] %vm687, %v2247
      %2331 = vst.msk [vmem:[%s2310 + $0xa0] sm:$0xff] %vm687, %v2252
      %2332 = vst.msk [vmem:[%s2310 + $0xa8] sm:$0xff] %vm687, %v2257
      %2333 = vst.msk [vmem:[%s2310 + $0xb0] sm:$0xff] %vm687, %v2262
      %2334 = vst.msk [vmem:[%s2310 + $0xb8] sm:$0xff] %vm687, %v2267
      %2335 = vst.msk [vmem:[%s2310 + $0xc0] sm:$0xff] %vm687, %v2272
      %2336 = vst.msk [vmem:[%s2310 + $0xc8] sm:$0xff] %vm687, %v2277
      %2337 = vst.msk [vmem:[%s2310 + $0xd0] sm:$0xff] %vm687, %v2282
      %2338 = vst.msk [vmem:[%s2310 + $0xd8] sm:$0xff] %vm687, %v2287
      %2339 = vst.msk [vmem:[%s2310 + $0xe0] sm:$0xff] %vm687, %v2292
      %2340 = vst.msk [vmem:[%s2310 + $0xe8] sm:$0xff] %vm687, %v2297
      %2341 = vst.msk [vmem:[%s2310 + $0xf0] sm:$0xff] %vm687, %v2302
      %2342 = vst.msk [vmem:[%s2310 + $0xf8] sm:$0xff] %vm687, %v2307
      %p2343 = scmp.lt.s32.totalorder %s18, 1
      %s2344 = scalar_select %p2343, %s18, 1
      %p2345 = scmp.lt.s32.totalorder %s19, 0
      %s2346 = scalar_select %p2345, %s19, 0
      %s2347 = smul.addr %s2346, 128
      %s2348 = smul.addr %s2344, 128
      %s2349 = sadd.s32 %s2347, %s2348
      %s2350 = smul.addr %s2349, 8
      %s2351 = scalar_lea.vmem %s3, %s2350
      // Predicated region
      $region33: #{upsample_forward.1} parent=31 // pred_check
        %p2352 = pneg %p116
      $region34: #{upsample_forward.1} parent=31 // pred_check_branch
        %2354 = sbr.rel (%p2352) target = $region36
      $region35: #{upsample_forward.1} parent=31 // pred_region
        _
      $region36: #{upsample_forward.1} parent=31 // pred_fallthru
        _
    $region32: #{upsample_forward.1} parent=5 // pred_fallthru
      _
    %p2355 = scmp.le.s32.totalorder 2, %s9
    // Predicated region
    $region37: #{upsample_forward.1} parent=5 // pred_check
      %p2356 = pneg %p2355
    $region38: #{upsample_forward.1} parent=5 // pred_check_branch
      %2358 = sbr.rel (%p2356) target = $region40
    $region39: #{upsample_forward.1} parent=5 // pred_region
      %s2359 = ssub.s32 %s9, 2
      // Predicated region
      $region41: #{upsample_forward.1} parent=39 // pred_check
        %p2360 = pneg %p122
      $region42: #{upsample_forward.1} parent=39 // pred_check_branch
        %2362 = sbr.rel (%p2360) target = $region44
      $region43: #{upsample_forward.1} parent=39 // pred_region
        %p2363 = scmp.lt.s32.totalorder %s20, 1
        %s2364 = scalar_select %p2363, %s20, 1
        %p2365 = scmp.lt.s32.totalorder %s21, 0
        %s2366 = scalar_select %p2365, %s21, 0
        %s2367 = smul.addr %s2366, 128
        %s2368 = smul.addr %s2364, 128
        %s2369 = sadd.s32 %s2367, %s2368
        %s2370 = smul.addr %s2369, 8
        %s2371 = scalar_lea.vmem %s3, %s2370
      $region44: #{upsample_forward.1} parent=39 // pred_fallthru
        _
    $region40: #{upsample_forward.1} parent=5 // pred_fallthru
      _
  $region6: #{upsample_forward.1} parent=0 // loop_footer
    %s13 = sadd.s32 1, %s9
  $region7: #{upsample_forward.1} parent=0 // loop_footer_branch
    %8 = sbr.rel target = $region3
  $region8: #{upsample_forward.1} parent=0 // loop_exit
    _

</llo_original>
